<compile_context>
chip_gen: v7x
topology: tpu7x:2x2x1
jax: 0.10.0
libtpu: 0.0.40
codegen_flags: <defaults>
</compile_context>

<pallas_src>
import functools
import math

import numpy as np
import jax
import jax.numpy as jnp
from jax import lax
from jax.experimental import pallas as pl
from jax.experimental.pallas import tpu as pltpu


# ----------------------------- tiling helpers --------------------------------

def _round_up(x, m):
    return ((x + m - 1) // m) * m


def _pick_tile(dim, target, mult):
    """Largest divisor of `dim` that is a multiple of `mult` and <= target;
    falls back to the full dim (legal: block dim == full array dim)."""
    if dim <= target:
        return dim
    t = (target // mult) * mult
    while t >= mult:
        if dim % t == 0:
            return t
        t -= mult
    return dim


def _pad_rows(x, mult):
    """Pad axis 0 up to a multiple of `mult` (static no-op when aligned)."""
    m = x.shape[0]
    mp = _round_up(m, mult)
    if mp != m:
        x = jnp.pad(x, ((0, mp - m),) + ((0, 0),) * (x.ndim - 1))
    return x, m


# ----------------------------- Pallas kernels --------------------------------

def _linear_kernel(x_ref, w_ref, b_ref, o_ref, acc_ref, *, activation):
    """Tiled y = x @ w + b with f32 VMEM accumulator over the K grid axis."""
    @pl.when(pl.program_id(2) == 0)
    def _():
        acc_ref[...] = jnp.zeros_like(acc_ref)

    acc_ref[...] += jnp.dot(x_ref[...], w_ref[...],
                            preferred_element_type=jnp.float32)

    @pl.when(pl.program_id(2) == pl.num_programs(2) - 1)
    def _():
        y = acc_ref[...] + b_ref[...]
        if activation == "relu":
            y = jnp.maximum(y, 0.0)
        o_ref[...] = y.astype(o_ref.dtype)


def pallas_linear(x, w, b, activation=None, out_dtype=jnp.bfloat16):
    """y = x @ w + b (+ optional fused ReLU). bf16 MXU operands, f32 accum,
    output written directly in out_dtype (bf16 by default)."""
    _, K = x.shape
    N = w.shape[1]
    x = x.astype(jnp.bfloat16)
    w = w.astype(jnp.bfloat16)
    b2 = b.astype(jnp.float32).reshape(1, N)
    x, M = _pad_rows(x, 16)
    Mp = x.shape[0]
    TM = _pick_tile(Mp, 256, 16)
    TN = _pick_tile(N, 256, 128)
    TK = _pick_tile(K, 512, 128)
    grid = (Mp // TM, N // TN, K // TK)
    out = pl.pallas_call(
        functools.partial(_linear_kernel, activation=activation),
        out_shape=jax.ShapeDtypeStruct((Mp, N), out_dtype),
        grid=grid,
        in_specs=[
            pl.BlockSpec((TM, TK), lambda i, j, k: (i, k)),
            pl.BlockSpec((TK, TN), lambda i, j, k: (k, j)),
            pl.BlockSpec((1, TN), lambda i, j, k: (0, j)),
        ],
        out_specs=pl.BlockSpec((TM, TN), lambda i, j, k: (i, j)),
        scratch_shapes=[pltpu.VMEM((TM, TN), jnp.float32)],
        compiler_params=pltpu.CompilerParams(
            dimension_semantics=("parallel", "parallel", "arbitrary")),
    )(x, w, b2)
    return out[:M] if Mp != M else out


def _mha_kernel(klen_ref, q_ref, kv_ref, o_ref, m_sc, l_sc, acc_sc,
                *, n_head, dh, causal):
    """Flash-style attention for one (batch, q-tile); online softmax across the
    K-tile grid axis.  Heads are sliced in-kernel from the fused (tq,D) /
    (tk,2D) blocks; output is written lane-dense as (tq, D).  Key-pad / causal
    masks are built in-kernel from the scalar-prefetched key lengths; K tiles
    fully past the key length or fully above the causal diagonal are skipped."""
    b = pl.program_id(0)
    qi = pl.program_id(1)
    ki = pl.program_id(2)
    tq = q_ref.shape[1]
    tk = kv_ref.shape[1]
    D = q_ref.shape[2]
    klen = klen_ref[b]

    @pl.when(ki == 0)
    def _():
        m_sc[...] = jnp.full_like(m_sc, -1e30)
        l_sc[...] = jnp.zeros_like(l_sc)
        acc_sc[...] = jnp.zeros_like(acc_sc)

    k_start = ki * tk
    live = k_start < klen
    if causal:
        live = jnp.logical_and(live, k_start <= qi * tq + tq - 1)

    @pl.when(live)
    def _():
        col = k_start + lax.broadcasted_iota(jnp.int32, (1, tk), 1)
        mask = col >= klen                                   # (1, tk) key-pad
        if causal:
            row = qi * tq + lax.broadcasted_iota(jnp.int32, (tq, 1), 0)
            mask = jnp.logical_or(mask, col > row)           # (tq, tk)
        for h in range(n_head):
            q_h = q_ref[0, :, h * dh:(h + 1) * dh]           # (tq, dh) bf16
            k_h = kv_ref[0, :, h * dh:(h + 1) * dh]          # (tk, dh) bf16
            v_h = kv_ref[0, :, D + h * dh:D + (h + 1) * dh]  # (tk, dh) bf16
            s = lax.dot_general(q_h, k_h, (((1,), (1,)), ((), ())),
                                preferred_element_type=jnp.float32)  # (tq,tk)
            s = jnp.where(mask, -1e30, s)
            m_prev = m_sc[h]
            m_new = jnp.maximum(m_prev, jnp.max(s, axis=-1, keepdims=True))
            alpha = jnp.exp(m_prev - m_new)
            p = jnp.exp(s - m_new)
            l_sc[h] = alpha * l_sc[h] + jnp.sum(p, axis=-1, keepdims=True)
            acc_sc[h] = alpha * acc_sc[h] + jnp.dot(
                p.astype(jnp.bfloat16), v_h, preferred_element_type=jnp.float32)
            m_sc[h] = m_new

    @pl.when(ki == pl.num_programs(2) - 1)
    def _():
        outs = []
        for h in range(n_head):
            l = l_sc[h]
            l = jnp.where(l > 0.0, l, 1.0)   # guard fully-masked rows
            outs.append(acc_sc[h] * pl.reciprocal(l, approx=True))
        o_ref[0] = jnp.concatenate(outs, axis=-1).astype(o_ref.dtype)


def pallas_attention(q, kv, key_len, *, n_head, causal):
    """q: (B, Tq, D) bf16; kv: (B, Tk, 2D) bf16 (K then V, head-major columns);
    key_len: (B,) int32 valid-key lengths (padding is a contiguous suffix).
    1/sqrt(dh) is already folded into the Q projection weights."""
    B, Tq, D = q.shape
    Tk = kv.shape[1]
    dh = D // n_head
    q = q.astype(jnp.bfloat16)
    kv = kv.astype(jnp.bfloat16)
    Tqp = _round_up(Tq, 16)
    Tkp = _round_up(Tk, 16)
    if Tqp != Tq:
        q = jnp.pad(q, ((0, 0), (0, Tqp - Tq), (0, 0)))
    if Tkp != Tk:
        kv = jnp.pad(kv, ((0, 0), (0, Tkp - Tk), (0, 0)))
    tq = _pick_tile(Tqp, 128, 16)
    tk = _pick_tile(Tkp, 256, 16)
    grid = (B, Tqp // tq, Tkp // tk)
    out = pl.pallas_call(
        functools.partial(_mha_kernel, n_head=n_head, dh=dh, causal=causal),
        out_shape=jax.ShapeDtypeStruct((B, Tqp, D), jnp.bfloat16),
        grid_spec=pltpu.PrefetchScalarGridSpec(
            num_scalar_prefetch=1,
            grid=grid,
            in_specs=[
                pl.BlockSpec((1, tq, D), lambda b, qi, ki, kl: (b, qi, 0)),
                pl.BlockSpec((1, tk, 2 * D), lambda b, qi, ki, kl: (b, ki, 0)),
            ],
            out_specs=pl.BlockSpec((1, tq, D), lambda b, qi, ki, kl: (b, qi, 0)),
            scratch_shapes=[
                pltpu.VMEM((n_head, tq, 1), jnp.float32),
                pltpu.VMEM((n_head, tq, 1), jnp.float32),
                pltpu.VMEM((n_head, tq, dh), jnp.float32),
            ]),
        compiler_params=pltpu.CompilerParams(
            dimension_semantics=("parallel", "parallel", "arbitrary")),
    )(key_len.astype(jnp.int32), q, kv)
    return out[:, :Tq, :] if Tqp != Tq else out


def _add_ln_kernel(x_ref, r_ref, g_ref, b_ref, o_ref, *, eps):
    x = x_ref[...].astype(jnp.float32) + r_ref[...].astype(jnp.float32)
    mu = jnp.mean(x, axis=-1, keepdims=True)
    xc = x - mu
    var = jnp.mean(xc * xc, axis=-1, keepdims=True)
    y = xc * lax.rsqrt(var + eps) * g_ref[...] + b_ref[...]
    o_ref[...] = y.astype(o_ref.dtype)


def pallas_add_layernorm(x, r, gamma, beta, eps=1e-5):
    """Fused residual-add + LayerNorm; bf16 in/out, f32 statistics."""
    D = x.shape[1]
    x = x.astype(jnp.bfloat16)
    r = r.astype(jnp.bfloat16)
    x, M = _pad_rows(x, 16)
    r, _ = _pad_rows(r, 16)
    Mp = x.shape[0]
    TR = _pick_tile(Mp, 256, 16)
    out = pl.pallas_call(
        functools.partial(_add_ln_kernel, eps=eps),
        out_shape=jax.ShapeDtypeStruct((Mp, D), jnp.bfloat16),
        grid=(Mp // TR,),
        in_specs=[
            pl.BlockSpec((TR, D), lambda i: (i, 0)),
            pl.BlockSpec((TR, D), lambda i: (i, 0)),
            pl.BlockSpec((1, D), lambda i: (0, 0)),
            pl.BlockSpec((1, D), lambda i: (0, 0)),
        ],
        out_specs=pl.BlockSpec((TR, D), lambda i: (i, 0)),
        compiler_params=pltpu.CompilerParams(dimension_semantics=("parallel",)),
    )(x, r, gamma.reshape(1, D), beta.reshape(1, D))
    return out[:M] if Mp != M else out


def _linear_logsoftmax_kernel(x_ref, w_ref, b_ref, o_ref):
    y = jnp.dot(x_ref[...], w_ref[...],
                preferred_element_type=jnp.float32) + b_ref[...]
    m = jnp.max(y, axis=-1, keepdims=True)
    s = y - m
    lse = jnp.log(jnp.sum(jnp.exp(s), axis=-1, keepdims=True))
    o_ref[...] = s - lse


def pallas_linear_logsoftmax(x, w, b):
    """Fused CTC head: (x @ w + b) followed by log_softmax, row-tiled."""
    _, K = x.shape
    N = w.shape[1]
    x = x.astype(jnp.bfloat16)
    w = w.astype(jnp.bfloat16)
    x, M = _pad_rows(x, 16)
    Mp = x.shape[0]
    TM = _pick_tile(Mp, 256, 16)
    # TODO(synk): for multi-thousand vocab on v7x (64 MiB VMEM) tile N with a
    # two-pass online max/sum log-softmax instead of a resident (K, N) weight.
    out = pl.pallas_call(
        _linear_logsoftmax_kernel,
        out_shape=jax.ShapeDtypeStruct((Mp, N), jnp.float32),
        grid=(Mp // TM,),
        in_specs=[
            pl.BlockSpec((TM, K), lambda i: (i, 0)),
            pl.BlockSpec((K, N), lambda i: (0, 0)),
            pl.BlockSpec((1, N), lambda i: (0, 0)),
        ],
        out_specs=pl.BlockSpec((TM, N), lambda i: (i, 0)),
        compiler_params=pltpu.CompilerParams(dimension_semantics=("parallel",)),
    )(x, w, b.astype(jnp.float32).reshape(1, N))
    return out[:M] if Mp != M else out


def _conv3x3_c1_kernel(x_ref, w_ref, b_ref, o_ref, *, Wp):
    """3x3 conv + ReLU for Cin=1: 9 scalar-weighted shifted slabs on the VPU
    (no K=1 MXU matmuls).  x_ref: (1, (H+3)*Wp, 1) bf16, w_ref: (9, Cout) f32."""
    L = o_ref.shape[1]
    Cout = o_ref.shape[2]
    acc = jnp.zeros((L, Cout), jnp.float32)
    for di in range(3):
        for dj in range(3):
            start = di * Wp + dj
            col = x_ref[0, start:start + L, :].astype(jnp.float32)       # (L,1)
            t = di * 3 + dj
            acc = acc + col * w_ref[t:t + 1, :]                          # (1,Cout)
    o_ref[0] = jnp.maximum(acc + b_ref[...], 0.0).astype(o_ref.dtype)


def _conv3x3_kernel(x_ref, w_ref, b_ref, o_ref, *, Wp):
    """3x3 / stride 1 / pad 1 conv + ReLU for one batch element (Cin > 1).
    Concatenates the 9 shifted slabs into one (L, 9*Cin) patch and does a
    single matmul with K = 9*Cin (fills MXU systolic depth)."""
    L = o_ref.shape[1]
    taps = []
    for di in range(3):
        for dj in range(3):
            start = di * Wp + dj
            taps.append(x_ref[0, start:start + L, :])
    patch = jnp.concatenate(taps, axis=-1)                      # (L, 9*Cin) bf16
    acc = jnp.dot(patch, w_ref[...], preferred_element_type=jnp.float32)
    o_ref[0] = jnp.maximum(acc + b_ref[...], 0.0).astype(o_ref.dtype)


def conv3x3_relu(p, x):
    """x: NHWC.  Weights p['w']: (9, Cout) f32 for Cin=1 else (9*Cin, Cout) bf16."""
    B, Hh, Ww, C = x.shape
    Cout = p["b"].shape[0]
    Wp = Ww + 2
    L = Hh * Wp
    # pad: 1 top, 2 bottom (last tap's slab needs 2 extra rows), 1 left/right;
    # bf16 in the wrapper halves the DMA and avoids in-kernel casts.
    xp = jnp.pad(x, ((0, 0), (1, 2), (1, 1), (0, 0))).astype(jnp.bfloat16)
    x_flat = xp.reshape(B, (Hh + 3) * Wp, C)
    # TODO(synk): at production T (H ~ 1000+) this per-batch block needs
    # halo-tiled row blocking to respect v7x's 64 MiB VMEM.
    if C == 1:
        kern = functools.partial(_conv3x3_c1_kernel, Wp=Wp)
        w_spec = pl.BlockSpec((9, Cout), lambda bb: (0, 0))
    else:
        kern = functools.partial(_conv3x3_kernel, Wp=Wp)
        w_spec = pl.BlockSpec((9 * C, Cout), lambda bb: (0, 0))
    out = pl.pallas_call(
        kern,
        out_shape=jax.ShapeDtypeStruct((B, L, Cout), jnp.bfloat16),
        grid=(B,),
        in_specs=[
            pl.BlockSpec((1, (Hh + 3) * Wp, C), lambda bb: (bb, 0, 0)),
            w_spec,
            pl.BlockSpec((1, Cout), lambda bb: (0, 0)),
        ],
        out_specs=pl.BlockSpec((1, L, Cout), lambda bb: (bb, 0, 0)),
        compiler_params=pltpu.CompilerParams(dimension_semantics=("parallel",)),
    )(x_flat, p["w"], p["b"].astype(jnp.float32).reshape(1, Cout))
    return out.reshape(B, Hh, Wp, Cout)[:, :, :Ww, :]


# ------------------------------ model pieces ---------------------------------

def linear3(p, x, activation=None, out_dtype=jnp.bfloat16):
    B, T, D = x.shape
    y = pallas_linear(x.reshape(B * T, D), p["w"], p["b"],
                      activation=activation, out_dtype=out_dtype)
    return y.reshape(B, T, -1)


def add_layernorm3(p, x, r):
    B, T, D = x.shape
    y = pallas_add_layernorm(x.reshape(B * T, D), r.reshape(B * T, D),
                             p["g"], p["b"])
    return y.reshape(B, T, D)


def sinusoidal_pe(length, dim):
    pos = np.arange(length, dtype=np.float32)[:, None]
    i = np.arange(dim // 2, dtype=np.float32)[None, :]
    angle = pos / np.power(10000.0, 2.0 * i / dim)
    pe = np.zeros((length, dim), np.float32)
    pe[:, 0::2] = np.sin(angle)
    pe[:, 1::2] = np.cos(angle)
    return jnp.asarray(pe)


def multi_head_attention(p, q_in, kv_in, key_len, n_head, causal=False):
    """key_len: (B,) int32 number of valid key positions (contiguous prefix).
    Q and fused KV projections output bf16 in (B, T, D)/(B, T, 2D) layout; the
    attention kernel slices heads internally and writes (B, Tq, D) bf16."""
    B, Tq, D = q_in.shape
    Tk = kv_in.shape[1]
    q = pallas_linear(q_in.reshape(B * Tq, D), p["wq"], p["bq"]).reshape(B, Tq, D)
    kv = pallas_linear(kv_in.reshape(B * Tk, D), p["wkv"], p["bkv"]).reshape(B, Tk, 2 * D)
    o = pallas_attention(q, kv, key_len, n_head=n_head, causal=causal)
    o = pallas_linear(o.reshape(B * Tq, D), p["o"]["w"], p["o"]["b"]).reshape(B, Tq, D)
    return o


def feed_forward(p, x):
    h = linear3(p["w1"], x, activation="relu")
    return linear3(p["w2"], h)


def encoder_forward(p_layers, x, enc_len, n_head):
    B, T, D = x.shape
    x = (x.astype(jnp.float32) + sinusoidal_pe(T, D)[None]).astype(jnp.bfloat16)
    for lp in p_layers:
        x = add_layernorm3(lp["ln1"], x,
                           multi_head_attention(lp["attn"], x, x, enc_len, n_head))
        x = add_layernorm3(lp["ln2"], x, feed_forward(lp["ffn"], x))
    return x


def decoder_forward(p, tgt_in, enc_out, enc_len, n_head):
    B, L = tgt_in.shape
    D = p["emb"].shape[1]
    x = jnp.take(p["emb"], tgt_in, axis=0)              # embedding gather (glue)
    x = (x + sinusoidal_pe(L, D)[None]).astype(jnp.bfloat16)
    # tgt_in has pads replaced by eos -> no key padding; mask is causal only.
    dec_len = jnp.full((B,), L, jnp.int32)
    for lp in p["layers"]:
        x = add_layernorm3(lp["ln1"], x,
                           multi_head_attention(lp["self"], x, x, dec_len,
                                                n_head, causal=True))
        x = add_layernorm3(lp["ln2"], x,
                           multi_head_attention(lp["cross"], x, enc_out,
                                                enc_len, n_head))
        x = add_layernorm3(lp["ln3"], x, feed_forward(lp["ffn"], x))
    return linear3(p["out"], x, out_dtype=jnp.float32)


def maxpool2x2(x):
    B, Hh, Ww, C = x.shape
    return x.reshape(B, Hh // 2, 2, Ww // 2, 2, C).max(axis=(2, 4))


def vgg_forward(p, inputs):
    x = inputs[..., None]                      # (B, T, F, 1)  NHWC
    x = conv3x3_relu(p["c1"], x)
    x = conv3x3_relu(p["c2"], x)
    x = maxpool2x2(x)
    x = conv3x3_relu(p["c3"], x)
    x = conv3x3_relu(p["c4"], x)
    x = maxpool2x2(x)                          # total time downsample /4
    B, Tp, Fp, C = x.shape
    x = x.transpose(0, 1, 3, 2).reshape(B, Tp, C * Fp)   # (B, T', C * F')
    return linear3(p["out"], x)


def make_in_out_np(tgt, pad_id, sos_id, eos_id):
    # boolean masked-select is data dependent -> host-side numpy glue
    tgt = np.asarray(tgt)
    btz = tgt.shape[0]
    tgt_in = tgt.copy()
    tgt_in[tgt_in == pad_id] = eos_id
    tgt_in = tgt_in.reshape(btz, -1)[:, :-1]
    tgt_out = tgt[tgt != sos_id].reshape(btz, -1)
    return tgt_in, tgt_out


# ------------------------------ parameters -----------------------------------

def xavier_uniform(key, shape):
    fan_in, fan_out = shape[0], shape[-1]
    limit = math.sqrt(6.0 / (fan_in + fan_out))
    return jax.random.uniform(key, shape, jnp.float32, minval=-limit, maxval=limit)


def init_params(key, *, in_dim, hidden_dim, filter_dim, enc_layers, dec_layers,
                out_dim, n_head):
    key_iter = iter(jax.random.split(key, 4096))
    nk = lambda: next(key_iter)

    def lin(k_in, k_out):
        return {"w": xavier_uniform(nk(), (k_in, k_out)).astype(jnp.bfloat16),
                "b": jnp.zeros((k_out,), jnp.float32)}

    def conv(c_in, c_out):
        w = xavier_uniform(nk(), (9 * c_in, c_out))
        dt = jnp.float32 if c_in == 1 else jnp.bfloat16
        return {"w": w.astype(dt), "b": jnp.zeros((c_out,), jnp.float32)}

    def ln():
        return {"g": jnp.ones((hidden_dim,), jnp.float32),
                "b": jnp.zeros((hidden_dim,), jnp.float32)}

    def mha():
        # precompute: fold 1/sqrt(dh) into Q weights, fuse K|V weights once.
        dh = hidden_dim // n_head
        scale = 1.0 / math.sqrt(dh)
        wq = xavier_uniform(nk(), (hidden_dim, hidden_dim)) * scale
        wk = xavier_uniform(nk(), (hidden_dim, hidden_dim))
        wv = xavier_uniform(nk(), (hidden_dim, hidden_dim))
        return {"wq": wq.astype(jnp.bfloat16),
                "bq": jnp.zeros((hidden_dim,), jnp.float32),
                "wkv": jnp.concatenate([wk, wv], axis=1).astype(jnp.bfloat16),
                "bkv": jnp.zeros((2 * hidden_dim,), jnp.float32),
                "o": lin(hidden_dim, hidden_dim)}

    def ffn():
        return {"w1": lin(hidden_dim, filter_dim), "w2": lin(filter_dim, hidden_dim)}

    return {
        "vgg": {
            "c1": conv(1, 64), "c2": conv(64, 64),
            "c3": conv(64, 128), "c4": conv(128, 128),
            "out": lin(128 * (in_dim // 4), hidden_dim),
        },
        "enc": [{"attn": mha(), "ln1": ln(), "ffn": ffn(), "ln2": ln()}
                for _ in range(enc_layers)],
        "dec": {
            "emb": jax.random.normal(nk(), (out_dim, hidden_dim), jnp.float32),
            "layers": [{"self": mha(), "ln1": ln(), "cross": mha(), "ln2": ln(),
                        "ffn": ffn(), "ln3": ln()} for _ in range(dec_layers)],
            "out": lin(hidden_dim, out_dim),
        },
        "ctc": lin(hidden_dim, out_dim),
    }


# ------------------------------ full forward ---------------------------------

def transformer_joint_ctc_forward(params, inputs, input_length, tgt, *,
                                  n_head, pad_id=0, sos_id=1, eos_id=2):
    btz = inputs.shape[0]
    # feature extractor (VGG) + /4 length subsampling
    feats = vgg_forward(params["vgg"], inputs)               # (B, T//4, H) bf16
    enc_len = (input_length >> 2).astype(jnp.int32)          # (B,) valid lengths
    # encoder
    enc_out = encoder_forward(params["enc"], feats, enc_len, n_head)
    # decoder (attention branch)
    tgt_in_np, att_golds = make_in_out_np(tgt, pad_id, sos_id, eos_id)
    tgt_in = jnp.asarray(tgt_in_np)
    att_out = decoder_forward(params["dec"], tgt_in, enc_out, enc_len, n_head)
    # CTC branch (dropout is identity in eval mode); fused linear + log_softmax
    B, Te, H = enc_out.shape
    ctc_out = pallas_linear_logsoftmax(enc_out.reshape(B * Te, H),
                                       params["ctc"]["w"], params["ctc"]["b"])
    ctc_out = ctc_out.reshape(B, Te, -1).transpose(1, 0, 2)  # (T', B, V)
    # label post-processing (data-dependent masked selects -> host numpy glue)
    ctc_golds = att_golds[att_golds != eos_id].reshape(btz, -1)
    golds_length = np.asarray([(row != pad_id).sum() for row in ctc_golds], np.int64)
    return att_out, att_golds, ctc_out, ctc_golds, enc_len, golds_length


# ---------------------------------- main --------------------------------------

if __name__ == "__main__":
    # small, forward-consistent config (defaults scaled down)
    B, T, IN_DIM = 2, 16, 16
    OUT_DIM, HIDDEN, FILTER, N_HEAD = 16, 32, 64, 4
    ENC_LAYERS, DEC_LAYERS = 2, 2

    root = jax.random.PRNGKey(0)
    k_param, k_input = jax.random.split(root)
    params = init_params(k_param, in_dim=IN_DIM, hidden_dim=HIDDEN, filter_dim=FILTER,
                         enc_layers=ENC_LAYERS, dec_layers=DEC_LAYERS,
                         out_dim=OUT_DIM, n_head=N_HEAD)

    inputs = jax.random.normal(k_input, (B, T, IN_DIM), jnp.float32)
    input_length = jnp.array([16, 12], jnp.int32)
    # tgt: <sos>=1 ... <eos>=2, pad=0  (one sos and one eos per row)
    tgt = np.array([[1, 5, 6, 7, 8, 2, 0, 0],
                    [1, 3, 4, 2, 0, 0, 0, 0]], dtype=np.int32)

    att_out, att_golds, ctc_out, ctc_golds, out_len, golds_len = \
        transformer_joint_ctc_forward(params, inputs, input_length, tgt, n_head=N_HEAD)

    jax.block_until_ready(att_out)
    jax.block_until_ready(ctc_out)
    jax.block_until_ready(out_len)
    assert att_out.shape == (B, tgt.shape[1] - 1, OUT_DIM)
    assert ctc_out.shape == (T // 4, B, OUT_DIM)
    assert bool(jnp.all(jnp.isfinite(att_out))) and bool(jnp.all(jnp.isfinite(ctc_out)))
    print("KERNEL_OK")
</pallas_src>

<mosaic_0001>
module attributes {stable_mosaic.version = 11 : i64} {
  func.func @_conv3x3_c1_kernel(%arg0: i32, %arg1: memref<1x342x1xbf16, #tpu.memory_space<vmem>>, %arg2: memref<9x64xf32, #tpu.memory_space<vmem>>, %arg3: memref<1x64xf32, #tpu.memory_space<vmem>>, %arg4: memref<1x288x64xbf16, #tpu.memory_space<vmem>>) attributes {dimension_semantics = [#tpu.dimension_semantics<parallel>], iteration_bounds = array<i64: 2>, scalar_prefetch = 0 : i64, scratch_operands = 0 : i64, tpu.core_type = #tpu.core_type<tc>, window_params = [{transform_indices = @transform_0, window_bounds = array<i64: 1, 342, 1>}, {pipeline_mode = #tpu.pipeline_mode<synchronous>, transform_indices = @transform_1, window_bounds = array<i64: 9, 64>}, {pipeline_mode = #tpu.pipeline_mode<synchronous>, transform_indices = @transform_2, window_bounds = array<i64: 1, 64>}, {transform_indices = @transform_3, window_bounds = array<i64: 1, 288, 64>}]} {
    %cst = arith.constant 0.000000e+00 : f32
    %0 = vector.broadcast %cst : f32 to vector<288x64xf32>
    %c0 = arith.constant 0 : index
    %c0_0 = arith.constant 0 : index
    %c0_1 = arith.constant 0 : index
    %1 = vector.load %arg1[%c0, %c0_0, %c0_1] : memref<1x342x1xbf16, #tpu.memory_space<vmem>>, vector<1x288x1xbf16>
    %2 = vector.shape_cast %1 : vector<1x288x1xbf16> to vector<288x1xbf16>
    %3 = arith.extf %2 : vector<288x1xbf16> to vector<288x1xf32>
    %c0_2 = arith.constant 0 : index
    %c0_3 = arith.constant 0 : index
    %4 = vector.load %arg2[%c0_2, %c0_3] : memref<9x64xf32, #tpu.memory_space<vmem>>, vector<1x64xf32>
    %5 = vector.broadcast %3 : vector<288x1xf32> to vector<288x64xf32>
    %6 = vector.broadcast %4 : vector<1x64xf32> to vector<288x64xf32>
    %7 = arith.mulf %5, %6 : vector<288x64xf32>
    %8 = arith.addf %0, %7 : vector<288x64xf32>
    %c0_4 = arith.constant 0 : index
    %c1 = arith.constant 1 : index
    %c0_5 = arith.constant 0 : index
    %9 = vector.load %arg1[%c0_4, %c1, %c0_5] : memref<1x342x1xbf16, #tpu.memory_space<vmem>>, vector<1x288x1xbf16>
    %10 = vector.shape_cast %9 : vector<1x288x1xbf16> to vector<288x1xbf16>
    %11 = arith.extf %10 : vector<288x1xbf16> to vector<288x1xf32>
    %c1_6 = arith.constant 1 : index
    %c0_7 = arith.constant 0 : index
    %12 = vector.load %arg2[%c1_6, %c0_7] : memref<9x64xf32, #tpu.memory_space<vmem>>, vector<1x64xf32>
    %13 = vector.broadcast %11 : vector<288x1xf32> to vector<288x64xf32>
    %14 = vector.broadcast %12 : vector<1x64xf32> to vector<288x64xf32>
    %15 = arith.mulf %13, %14 : vector<288x64xf32>
    %16 = arith.addf %8, %15 : vector<288x64xf32>
    %c0_8 = arith.constant 0 : index
    %c2 = arith.constant 2 : index
    %c0_9 = arith.constant 0 : index
    %17 = vector.load %arg1[%c0_8, %c2, %c0_9] : memref<1x342x1xbf16, #tpu.memory_space<vmem>>, vector<1x288x1xbf16>
    %18 = vector.shape_cast %17 : vector<1x288x1xbf16> to vector<288x1xbf16>
    %19 = arith.extf %18 : vector<288x1xbf16> to vector<288x1xf32>
    %c2_10 = arith.constant 2 : index
    %c0_11 = arith.constant 0 : index
    %20 = vector.load %arg2[%c2_10, %c0_11] : memref<9x64xf32, #tpu.memory_space<vmem>>, vector<1x64xf32>
    %21 = vector.broadcast %19 : vector<288x1xf32> to vector<288x64xf32>
    %22 = vector.broadcast %20 : vector<1x64xf32> to vector<288x64xf32>
    %23 = arith.mulf %21, %22 : vector<288x64xf32>
    %24 = arith.addf %16, %23 : vector<288x64xf32>
    %c0_12 = arith.constant 0 : index
    %c18 = arith.constant 18 : index
    %c0_13 = arith.constant 0 : index
    %25 = vector.load %arg1[%c0_12, %c18, %c0_13] : memref<1x342x1xbf16, #tpu.memory_space<vmem>>, vector<1x288x1xbf16>
    %26 = vector.shape_cast %25 : vector<1x288x1xbf16> to vector<288x1xbf16>
    %27 = arith.extf %26 : vector<288x1xbf16> to vector<288x1xf32>
    %c3 = arith.constant 3 : index
    %c0_14 = arith.constant 0 : index
    %28 = vector.load %arg2[%c3, %c0_14] : memref<9x64xf32, #tpu.memory_space<vmem>>, vector<1x64xf32>
    %29 = vector.broadcast %27 : vector<288x1xf32> to vector<288x64xf32>
    %30 = vector.broadcast %28 : vector<1x64xf32> to vector<288x64xf32>
    %31 = arith.mulf %29, %30 : vector<288x64xf32>
    %32 = arith.addf %24, %31 : vector<288x64xf32>
    %c0_15 = arith.constant 0 : index
    %c19 = arith.constant 19 : index
    %c0_16 = arith.constant 0 : index
    %33 = vector.load %arg1[%c0_15, %c19, %c0_16] : memref<1x342x1xbf16, #tpu.memory_space<vmem>>, vector<1x288x1xbf16>
    %34 = vector.shape_cast %33 : vector<1x288x1xbf16> to vector<288x1xbf16>
    %35 = arith.extf %34 : vector<288x1xbf16> to vector<288x1xf32>
    %c4 = arith.constant 4 : index
    %c0_17 = arith.constant 0 : index
    %36 = vector.load %arg2[%c4, %c0_17] : memref<9x64xf32, #tpu.memory_space<vmem>>, vector<1x64xf32>
    %37 = vector.broadcast %35 : vector<288x1xf32> to vector<288x64xf32>
    %38 = vector.broadcast %36 : vector<1x64xf32> to vector<288x64xf32>
    %39 = arith.mulf %37, %38 : vector<288x64xf32>
    %40 = arith.addf %32, %39 : vector<288x64xf32>
    %c0_18 = arith.constant 0 : index
    %c20 = arith.constant 20 : index
    %c0_19 = arith.constant 0 : index
    %41 = vector.load %arg1[%c0_18, %c20, %c0_19] : memref<1x342x1xbf16, #tpu.memory_space<vmem>>, vector<1x288x1xbf16>
    %42 = vector.shape_cast %41 : vector<1x288x1xbf16> to vector<288x1xbf16>
    %43 = arith.extf %42 : vector<288x1xbf16> to vector<288x1xf32>
    %c5 = arith.constant 5 : index
    %c0_20 = arith.constant 0 : index
    %44 = vector.load %arg2[%c5, %c0_20] : memref<9x64xf32, #tpu.memory_space<vmem>>, vector<1x64xf32>
    %45 = vector.broadcast %43 : vector<288x1xf32> to vector<288x64xf32>
    %46 = vector.broadcast %44 : vector<1x64xf32> to vector<288x64xf32>
    %47 = arith.mulf %45, %46 : vector<288x64xf32>
    %48 = arith.addf %40, %47 : vector<288x64xf32>
    %c0_21 = arith.constant 0 : index
    %c36 = arith.constant 36 : index
    %c0_22 = arith.constant 0 : index
    %49 = vector.load %arg1[%c0_21, %c36, %c0_22] : memref<1x342x1xbf16, #tpu.memory_space<vmem>>, vector<1x288x1xbf16>
    %50 = vector.shape_cast %49 : vector<1x288x1xbf16> to vector<288x1xbf16>
    %51 = arith.extf %50 : vector<288x1xbf16> to vector<288x1xf32>
    %c6 = arith.constant 6 : index
    %c0_23 = arith.constant 0 : index
    %52 = vector.load %arg2[%c6, %c0_23] : memref<9x64xf32, #tpu.memory_space<vmem>>, vector<1x64xf32>
    %53 = vector.broadcast %51 : vector<288x1xf32> to vector<288x64xf32>
    %54 = vector.broadcast %52 : vector<1x64xf32> to vector<288x64xf32>
    %55 = arith.mulf %53, %54 : vector<288x64xf32>
    %56 = arith.addf %48, %55 : vector<288x64xf32>
    %c0_24 = arith.constant 0 : index
    %c37 = arith.constant 37 : index
    %c0_25 = arith.constant 0 : index
    %57 = vector.load %arg1[%c0_24, %c37, %c0_25] : memref<1x342x1xbf16, #tpu.memory_space<vmem>>, vector<1x288x1xbf16>
    %58 = vector.shape_cast %57 : vector<1x288x1xbf16> to vector<288x1xbf16>
    %59 = arith.extf %58 : vector<288x1xbf16> to vector<288x1xf32>
    %c7 = arith.constant 7 : index
    %c0_26 = arith.constant 0 : index
    %60 = vector.load %arg2[%c7, %c0_26] : memref<9x64xf32, #tpu.memory_space<vmem>>, vector<1x64xf32>
    %61 = vector.broadcast %59 : vector<288x1xf32> to vector<288x64xf32>
    %62 = vector.broadcast %60 : vector<1x64xf32> to vector<288x64xf32>
    %63 = arith.mulf %61, %62 : vector<288x64xf32>
    %64 = arith.addf %56, %63 : vector<288x64xf32>
    %c0_27 = arith.constant 0 : index
    %c38 = arith.constant 38 : index
    %c0_28 = arith.constant 0 : index
    %65 = vector.load %arg1[%c0_27, %c38, %c0_28] : memref<1x342x1xbf16, #tpu.memory_space<vmem>>, vector<1x288x1xbf16>
    %66 = vector.shape_cast %65 : vector<1x288x1xbf16> to vector<288x1xbf16>
    %67 = arith.extf %66 : vector<288x1xbf16> to vector<288x1xf32>
    %c8 = arith.constant 8 : index
    %c0_29 = arith.constant 0 : index
    %68 = vector.load %arg2[%c8, %c0_29] : memref<9x64xf32, #tpu.memory_space<vmem>>, vector<1x64xf32>
    %69 = vector.broadcast %67 : vector<288x1xf32> to vector<288x64xf32>
    %70 = vector.broadcast %68 : vector<1x64xf32> to vector<288x64xf32>
    %71 = arith.mulf %69, %70 : vector<288x64xf32>
    %72 = arith.addf %64, %71 : vector<288x64xf32>
    %c0_30 = arith.constant 0 : index
    %c0_31 = arith.constant 0 : index
    %73 = vector.load %arg3[%c0_30, %c0_31] : memref<1x64xf32, #tpu.memory_space<vmem>>, vector<1x64xf32>
    %74 = vector.broadcast %73 : vector<1x64xf32> to vector<288x64xf32>
    %75 = arith.addf %72, %74 : vector<288x64xf32>
    %cst_32 = arith.constant 0.000000e+00 : f32
    %76 = vector.broadcast %cst_32 : f32 to vector<288x64xf32>
    %77 = arith.maximumf %75, %76 : vector<288x64xf32>
    %78 = arith.truncf %77 : vector<288x64xf32> to vector<288x64xbf16>
    %c0_33 = arith.constant 0 : index
    %c0_34 = arith.constant 0 : index
    %c0_35 = arith.constant 0 : index
    %79 = vector.load %arg4[%c0_33, %c0_34, %c0_35] : memref<1x288x64xbf16, #tpu.memory_space<vmem>>, vector<1x288x64xbf16>
    %80 = vector.shape_cast %79 : vector<1x288x64xbf16> to vector<288x64xbf16>
    %81 = vector.shape_cast %78 : vector<288x64xbf16> to vector<1x288x64xbf16>
    tpu.vector_store %arg4[%c0_33, %c0_34, %c0_35], %81 {strides = array<i32>} : memref<1x288x64xbf16, #tpu.memory_space<vmem>>, vector<1x288x64xbf16>,
    return
  }
  func.func @transform_0(%arg0: i32) -> (i32, i32, i32) {
    %c0_i32 = arith.constant 0 : i32
    %c0_i32_0 = arith.constant 0 : i32
    %c0_i32_1 = arith.constant 0 : i32
    return %arg0, %c0_i32, %c0_i32_0 : i32, i32, i32
  }
  func.func @transform_1(%arg0: i32) -> (i32, i32) {
    %c0_i32 = arith.constant 0 : i32
    %c0_i32_0 = arith.constant 0 : i32
    %c0_i32_1 = arith.constant 0 : i32
    return %c0_i32, %c0_i32_0 : i32, i32
  }
  func.func @transform_2(%arg0: i32) -> (i32, i32) {
    %c0_i32 = arith.constant 0 : i32
    %c0_i32_0 = arith.constant 0 : i32
    %c0_i32_1 = arith.constant 0 : i32
    return %c0_i32, %c0_i32_0 : i32, i32
  }
  func.func @transform_3(%arg0: i32) -> (i32, i32, i32) {
    %c0_i32 = arith.constant 0 : i32
    %c0_i32_0 = arith.constant 0 : i32
    %c0_i32_1 = arith.constant 0 : i32
    return %arg0, %c0_i32, %c0_i32_0 : i32, i32, i32
  }
}

</mosaic_0001>

<llo_original>
// kernel: tpu_custom_call.1
$region0: #{tpu_custom_call.1}
  #allocation0 [shape = 'u32[]', space=smem, size = 0x4, offset = 0x4, fixed_abs, tag = 'smem constant byte address 0x4 - core index']
  #allocation1 [shape = 'u32[144,128]{1,0:T(1,128)}', space=vmem, size = 0x12000, scoped, tag = 'internal scratch']
  %s0 = inlined_call_operand.vmem [shape: bf16[2,342,1], index: 0, kind: input, shape index: {}]
  %s1 = inlined_call_operand.vmem [shape: f32[9,64], index: 1, kind: input, shape index: {}]
  %s2 = inlined_call_operand.vmem [shape: f32[1,64], index: 2, kind: input, shape index: {}]
  %s3 = inlined_call_operand.vmem [shape: bf16[2,288,64], index: 3, kind: output, shape index: {}]
  %s4 = sld [smem:[#allocation0]]
  $region45: #{tpu_custom_call.1} parent=0
    _
  %s6 = ssub.s32 1, %s4
  %s7 = scalar_select 0, %s6, %s4
  loop: start=0, step=1, limit=4
  $region2: #{tpu_custom_call.1} parent=0 // loop_pre_header
    _
  $region3: #{tpu_custom_call.1} parent=0 // loop_header
    %s9 = sphi 0, %s13
    %p10 = scmp.ge.s32.totalorder %s9, 4
    %s19 = sphi 0, %s21
    %s22 = sphi 0, %s19
    %s23 = sphi 0, %s22
    %s39 = sphi 0, %s23
    %s43 = sphi 0, %s43
    %s45 = sphi 0, %s43
    %s46 = sphi 0, %s45
    %s60 = sphi 0, %s46
    %s64 = sphi 0, %s64
    %s66 = sphi 0, %s64
    %s67 = sphi 0, %s66
    %s81 = sphi 0, %s67
    %s87 = sphi 0, %s89
    %s90 = sphi 0, %s87
    %s91 = sphi 0, %s90
    %s107 = sphi 0, %s91
  $region4: #{tpu_custom_call.1} parent=0 // loop_header_branch
    %12 = sbr.rel (%p10) target = $region8
  $region5: #{tpu_custom_call.1} parent=0 // loop_body
    %s14 = ssub.s32 %s9, 1
    %s15 = ssub.s32 %s9, 2
    %s16 = sadd.s32 %s9, 1
    %s17 = ssub.s32 %s9, %s16
    %p18 = scmp.eq.s32.totalorder %s17, 0
    %s20 = sadd.s32 %s19, 1
    %s21 = scalar_select %p18, %s19, %s20
    %p24 = pneg %p18
    %p25 = scmp.eq.s32.totalorder %s9, 1
    %p26 = por %p24, %p25
    %p27 = scmp.ne.s32.totalorder %s19, %s22
    %p28 = scmp.eq.s32.totalorder %s9, 0
    %p29 = por %p27, %p28
    %p30 = scmp.ne.s32.totalorder %s19, %s22
    %p31 = scmp.eq.s32.totalorder %s14, 1
    %p32 = por %p30, %p31
    %p33 = scmp.ne.s32.totalorder %s22, %s23
    %p34 = scmp.eq.s32.totalorder %s14, 0
    %p35 = por %p33, %p34
    %p36 = scmp.ne.s32.totalorder %s22, %s23
    %p37 = scmp.eq.s32.totalorder %s15, 1
    %p38 = por %p36, %p37
    %p40 = scmp.ne.s32.totalorder %s23, %s39
    %p41 = scmp.eq.s32.totalorder %s15, 0
    %p42 = por %p40, %p41
    %s44 = sadd.s32 %s43, 1
    %p47 = scmp.eq.s32.totalorder %s9, 1
    %p48 = scmp.ne.s32.totalorder %s43, %s45
    %p49 = scmp.eq.s32.totalorder %s9, 0
    %p50 = por %p48, %p49
    %p51 = scmp.ne.s32.totalorder %s43, %s45
    %p52 = scmp.eq.s32.totalorder %s14, 1
    %p53 = por %p51, %p52
    %p54 = scmp.ne.s32.totalorder %s45, %s46
    %p55 = scmp.eq.s32.totalorder %s14, 0
    %p56 = por %p54, %p55
    %p57 = scmp.ne.s32.totalorder %s45, %s46
    %p58 = scmp.eq.s32.totalorder %s15, 1
    %p59 = por %p57, %p58
    %p61 = scmp.ne.s32.totalorder %s46, %s60
    %p62 = scmp.eq.s32.totalorder %s15, 0
    %p63 = por %p61, %p62
    %s65 = sadd.s32 %s64, 1
    %p68 = scmp.eq.s32.totalorder %s9, 1
    %p69 = scmp.ne.s32.totalorder %s64, %s66
    %p70 = scmp.eq.s32.totalorder %s9, 0
    %p71 = por %p69, %p70
    %p72 = scmp.ne.s32.totalorder %s64, %s66
    %p73 = scmp.eq.s32.totalorder %s14, 1
    %p74 = por %p72, %p73
    %p75 = scmp.ne.s32.totalorder %s66, %s67
    %p76 = scmp.eq.s32.totalorder %s14, 0
    %p77 = por %p75, %p76
    %p78 = scmp.ne.s32.totalorder %s66, %s67
    %p79 = scmp.eq.s32.totalorder %s15, 1
    %p80 = por %p78, %p79
    %p82 = scmp.ne.s32.totalorder %s67, %s81
    %p83 = scmp.eq.s32.totalorder %s15, 0
    %p84 = por %p82, %p83
    %s85 = ssub.s32 %s9, %s16
    %p86 = scmp.eq.s32.totalorder %s85, 0
    %s88 = sadd.s32 %s87, 1
    %s89 = scalar_select %p86, %s87, %s88
    %p92 = pneg %p86
    %p93 = scmp.eq.s32.totalorder %s9, 1
    %p94 = por %p92, %p93
    %p95 = scmp.ne.s32.totalorder %s87, %s90
    %p96 = scmp.eq.s32.totalorder %s9, 0
    %p97 = por %p95, %p96
    %p98 = scmp.ne.s32.totalorder %s87, %s90
    %p99 = scmp.eq.s32.totalorder %s14, 1
    %p100 = por %p98, %p99
    %p101 = scmp.ne.s32.totalorder %s90, %s91
    %p102 = scmp.eq.s32.totalorder %s14, 0
    %p103 = por %p101, %p102
    %p104 = scmp.ne.s32.totalorder %s90, %s91
    %p105 = scmp.eq.s32.totalorder %s15, 1
    %p106 = por %p104, %p105
    %p108 = scmp.ne.s32.totalorder %s91, %s107
    %p109 = scmp.eq.s32.totalorder %s15, 0
    %p110 = por %p108, %p109
    %p111 = scmp.le.s32.totalorder 1, %s9
    %p112 = scmp.lt.s32.totalorder %s9, 3
    %p113 = pnand %p111, %p112
    %p114 = pneg %p113
    // Predicated region
    $region9: #{tpu_custom_call.1} parent=5 // pred_check
      _
    $region10: #{tpu_custom_call.1} parent=5 // pred_check_branch
      %116 = sbr.rel (%p113) target = $region12
    $region11: #{tpu_custom_call.1} parent=5 // pred_region
      %s117 = ssub.s32 %s9, 1
      // Predicated region
      $region13: #{tpu_custom_call.1} parent=11 // pred_check
        %p118 = pneg %p56
      $region14: #{tpu_custom_call.1} parent=11 // pred_check_branch
        %120 = sbr.rel (%p118) target = $region16
      $region15: #{tpu_custom_call.1} parent=11 // pred_region
        _
      $region16: #{tpu_custom_call.1} parent=11 // pred_fallthru
        _
      // Predicated region
      $region17: #{tpu_custom_call.1} parent=11 // pred_check
        %p121 = pneg %p77
      $region18: #{tpu_custom_call.1} parent=11 // pred_check_branch
        %123 = sbr.rel (%p121) target = $region20
      $region19: #{tpu_custom_call.1} parent=11 // pred_region
        _
      $region20: #{tpu_custom_call.1} parent=11 // pred_fallthru
        _
    $region12: #{tpu_custom_call.1} parent=5 // pred_fallthru
      _
    %p124 = scmp.lt.s32.totalorder %s9, 2
    // Predicated region
    $region21: #{tpu_custom_call.1} parent=5 // pred_check
      %p125 = pneg %p124
    $region22: #{tpu_custom_call.1} parent=5 // pred_check_branch
      %127 = sbr.rel (%p125) target = $region24
    $region23: #{tpu_custom_call.1} parent=5 // pred_region
      // Predicated region
      $region25: #{tpu_custom_call.1} parent=23 // pred_check
        %p128 = pneg %p29
      $region26: #{tpu_custom_call.1} parent=23 // pred_check_branch
        %130 = sbr.rel (%p128) target = $region28
      $region27: #{tpu_custom_call.1} parent=23 // pred_region
        %p131 = scmp.lt.s32.totalorder %s9, 1
        %s132 = scalar_select %p131, %s9, 1
        %s133 = smul.addr %s132, 43
        %s134 = smul.addr %s133, 4
        %s135 = scalar_lea.vmem %s0, %s134
      $region28: #{tpu_custom_call.1} parent=23 // pred_fallthru
        _
    $region24: #{tpu_custom_call.1} parent=5 // pred_fallthru
      _
    %p136 = scmp.le.s32.totalorder 1, %s9
    %p137 = scmp.lt.s32.totalorder %s9, 3
    %p138 = pnand %p136, %p137
    %p139 = pneg %p138
    // Predicated region
    $region29: #{tpu_custom_call.1} parent=5 // pred_check
      _
    $region30: #{tpu_custom_call.1} parent=5 // pred_check_branch
      %141 = sbr.rel (%p138) target = $region32
    $region31: #{tpu_custom_call.1} parent=5 // pred_region
      %s142 = ssub.s32 %s9, 1
      %p143 = scmp.lt.s32.totalorder %s14, 1
      %s144 = scalar_select %p143, %s14, 1
      %s145 = smul.addr %s144, 43
      %s146 = smul.addr %s145, 4
      %s147 = scalar_lea.vmem %s0, %s146
      %p148 = pneg %p35
      %p149 = pneg %p32
      %p150 = pneg %p56
      %p151 = pneg %p53
      %p152 = pneg %p77
      %p153 = pneg %p74
      %p154 = pneg %p103
      %p155 = pneg %p100
      %p156 = scmp.lt.s32.totalorder %s14, 1
      %s157 = scalar_select %p156, %s14, 1
      %s158 = smul.addr %s157, 36
      %s159 = smul.addr %s158, 4
      %s160 = scalar_lea.vmem %s3, %s159
      %p161 = scmp.lt.s32.totalorder %s14, 1
      %s162 = scalar_select %p161, %s14, 1
      %s163 = smul.addr %s162, 43
      %s164 = smul.addr %s163, 4
      %s165 = scalar_lea.vmem %s0, %s164
      %p166 = scmp.lt.s32.totalorder %s14, 1
      %s167 = scalar_select %p166, %s14, 1
      %s168 = smul.addr %s167, 36
      %s169 = smul.addr %s168, 4
      %s170 = scalar_lea.vmem %s3, %s169
      %v171 = vld [vmem:[%s165] sm:$0xf]
      %v172 = vld [vmem:[%s165 + $0x4] sm:$0xf]
      %v173 = vld [vmem:[%s165 + $0x8] sm:$0xf]
      %v174 = vld [vmem:[%s165 + $0xc] sm:$0xf]
      %v175 = vld [vmem:[%s165 + $0x10] sm:$0xf]
      %v176 = vld [vmem:[%s165 + $0x14] sm:$0xf]
      %v177 = vld [vmem:[%s165 + $0x18] sm:$0xf]
      %v178 = vld [vmem:[%s165 + $0x1c] sm:$0xf]
      %v179 = vld [vmem:[%s165 + $0x20] sm:$0xf]
      %v180 = vld [vmem:[%s165 + $0x24] sm:$0xf]
      %v181 = vld [vmem:[%s165 + $0x28] sm:$0xf]
      %v182 = vld [vmem:[%s165 + $0x2c] sm:$0xf]
      %v183 = vld [vmem:[%s165 + $0x30] sm:$0xf]
      %v184 = vld [vmem:[%s165 + $0x34] sm:$0xf]
      %v185 = vld [vmem:[%s165 + $0x38] sm:$0xf]
      %v186 = vld [vmem:[%s165 + $0x3c] sm:$0xf]
      %v187 = vld [vmem:[%s165 + $0x40] sm:$0xf]
      %v188 = vld [vmem:[%s165 + $0x44] sm:$0xf]
      %v189 = vld [vmem:[%s165 + $0x48] sm:$0xf]
      %v190 = vld [vmem:[%s165 + $0x4c] sm:$0xf]
      %v191 = vld [vmem:[%s165 + $0x50] sm:$0xf]
      %v192 = vld [vmem:[%s165 + $0x54] sm:$0xf]
      %v193 = vld [vmem:[%s165 + $0x58] sm:$0xf]
      %v194 = vld [vmem:[%s165 + $0x5c] sm:$0xf]
      %v195 = vld [vmem:[%s165 + $0x60] sm:$0xf]
      %v196 = vld [vmem:[%s165 + $0x64] sm:$0xf]
      %v197 = vld [vmem:[%s165 + $0x68] sm:$0xf]
      %v198 = vld [vmem:[%s165 + $0x6c] sm:$0xf]
      %v199 = vld [vmem:[%s165 + $0x70] sm:$0xf]
      %v200 = vld [vmem:[%s165 + $0x74] sm:$0xf]
      %v201 = vld [vmem:[%s165 + $0x78] sm:$0xf]
      %v202 = vld [vmem:[%s165 + $0x7c] sm:$0xf]
      %v203 = vld [vmem:[%s165 + $0x80] sm:$0xf]
      %v204 = vld [vmem:[%s165 + $0x84] sm:$0xf]
      %v205 = vld [vmem:[%s165 + $0x88] sm:$0xf]
      %v206 = vld [vmem:[%s165 + $0x8c] sm:$0xf]
      %v207 = vunpack.c.l.bf16 %v171
      %v208 = vunpack.c.l.bf16 %v172
      %v209 = vunpack.c.l.bf16 %v173
      %v210 = vunpack.c.l.bf16 %v174
      %v211 = vunpack.c.l.bf16 %v175
      %v212 = vunpack.c.l.bf16 %v176
      %v213 = vunpack.c.l.bf16 %v177
      %v214 = vunpack.c.l.bf16 %v178
      %v215 = vunpack.c.l.bf16 %v179
      %v216 = vunpack.c.l.bf16 %v180
      %v217 = vunpack.c.l.bf16 %v181
      %v218 = vunpack.c.l.bf16 %v182
      %v219 = vunpack.c.l.bf16 %v183
      %v220 = vunpack.c.l.bf16 %v184
      %v221 = vunpack.c.l.bf16 %v185
      %v222 = vunpack.c.l.bf16 %v186
      %v223 = vunpack.c.l.bf16 %v187
      %v224 = vunpack.c.l.bf16 %v188
      %v225 = vunpack.c.l.bf16 %v189
      %v226 = vunpack.c.l.bf16 %v190
      %v227 = vunpack.c.l.bf16 %v191
      %v228 = vunpack.c.l.bf16 %v192
      %v229 = vunpack.c.l.bf16 %v193
      %v230 = vunpack.c.l.bf16 %v194
      %v231 = vunpack.c.l.bf16 %v195
      %v232 = vunpack.c.l.bf16 %v196
      %v233 = vunpack.c.l.bf16 %v197
      %v234 = vunpack.c.l.bf16 %v198
      %v235 = vunpack.c.l.bf16 %v199
      %v236 = vunpack.c.l.bf16 %v200
      %v237 = vunpack.c.l.bf16 %v201
      %v238 = vunpack.c.l.bf16 %v202
      %v239 = vunpack.c.l.bf16 %v203
      %v240 = vunpack.c.l.bf16 %v204
      %v241 = vunpack.c.l.bf16 %v205
      %v242 = vunpack.c.l.bf16 %v206
      %v243 = vld [vmem:[%s1] sm:$0x1]
      %245 = vset.pattern.permute.xlu0 0
      %246 = vperm.xlu0 %245, %v207
      %v247 = vpop.permute.xlu0 %246
      %250 = vset.pattern.permute.xlu0 0
      %251 = vperm.xlu0 %250, %v208
      %v252 = vpop.permute.xlu0 %251
      %255 = vset.pattern.permute.xlu0 0
      %256 = vperm.xlu0 %255, %v209
      %v257 = vpop.permute.xlu0 %256
      %260 = vset.pattern.permute.xlu0 0
      %261 = vperm.xlu0 %260, %v210
      %v262 = vpop.permute.xlu0 %261
      %265 = vset.pattern.permute.xlu0 0
      %266 = vperm.xlu0 %265, %v211
      %v267 = vpop.permute.xlu0 %266
      %270 = vset.pattern.permute.xlu0 0
      %271 = vperm.xlu0 %270, %v212
      %v272 = vpop.permute.xlu0 %271
      %275 = vset.pattern.permute.xlu0 0
      %276 = vperm.xlu0 %275, %v213
      %v277 = vpop.permute.xlu0 %276
      %280 = vset.pattern.permute.xlu0 0
      %281 = vperm.xlu0 %280, %v214
      %v282 = vpop.permute.xlu0 %281
      %285 = vset.pattern.permute.xlu0 0
      %286 = vperm.xlu0 %285, %v215
      %v287 = vpop.permute.xlu0 %286
      %290 = vset.pattern.permute.xlu0 0
      %291 = vperm.xlu0 %290, %v216
      %v292 = vpop.permute.xlu0 %291
      %295 = vset.pattern.permute.xlu0 0
      %296 = vperm.xlu0 %295, %v217
      %v297 = vpop.permute.xlu0 %296
      %300 = vset.pattern.permute.xlu0 0
      %301 = vperm.xlu0 %300, %v218
      %v302 = vpop.permute.xlu0 %301
      %305 = vset.pattern.permute.xlu0 0
      %306 = vperm.xlu0 %305, %v219
      %v307 = vpop.permute.xlu0 %306
      %310 = vset.pattern.permute.xlu0 0
      %311 = vperm.xlu0 %310, %v220
      %v312 = vpop.permute.xlu0 %311
      %315 = vset.pattern.permute.xlu0 0
      %316 = vperm.xlu0 %315, %v221
      %v317 = vpop.permute.xlu0 %316
      %320 = vset.pattern.permute.xlu0 0
      %321 = vperm.xlu0 %320, %v222
      %v322 = vpop.permute.xlu0 %321
      %325 = vset.pattern.permute.xlu0 0
      %326 = vperm.xlu0 %325, %v223
      %v327 = vpop.permute.xlu0 %326
      %330 = vset.pattern.permute.xlu0 0
      %331 = vperm.xlu0 %330, %v224
      %v332 = vpop.permute.xlu0 %331
      %335 = vset.pattern.permute.xlu0 0
      %336 = vperm.xlu0 %335, %v225
      %v337 = vpop.permute.xlu0 %336
      %340 = vset.pattern.permute.xlu0 0
      %341 = vperm.xlu0 %340, %v226
      %v342 = vpop.permute.xlu0 %341
      %345 = vset.pattern.permute.xlu0 0
      %346 = vperm.xlu0 %345, %v227
      %v347 = vpop.permute.xlu0 %346
      %350 = vset.pattern.permute.xlu0 0
      %351 = vperm.xlu0 %350, %v228
      %v352 = vpop.permute.xlu0 %351
      %355 = vset.pattern.permute.xlu0 0
      %356 = vperm.xlu0 %355, %v229
      %v357 = vpop.permute.xlu0 %356
      %360 = vset.pattern.permute.xlu0 0
      %361 = vperm.xlu0 %360, %v230
      %v362 = vpop.permute.xlu0 %361
      %365 = vset.pattern.permute.xlu0 0
      %366 = vperm.xlu0 %365, %v231
      %v367 = vpop.permute.xlu0 %366
      %370 = vset.pattern.permute.xlu0 0
      %371 = vperm.xlu0 %370, %v232
      %v372 = vpop.permute.xlu0 %371
      %375 = vset.pattern.permute.xlu0 0
      %376 = vperm.xlu0 %375, %v233
      %v377 = vpop.permute.xlu0 %376
      %380 = vset.pattern.permute.xlu0 0
      %381 = vperm.xlu0 %380, %v234
      %v382 = vpop.permute.xlu0 %381
      %385 = vset.pattern.permute.xlu0 0
      %386 = vperm.xlu0 %385, %v235
      %v387 = vpop.permute.xlu0 %386
      %390 = vset.pattern.permute.xlu0 0
      %391 = vperm.xlu0 %390, %v236
      %v392 = vpop.permute.xlu0 %391
      %395 = vset.pattern.permute.xlu0 0
      %396 = vperm.xlu0 %395, %v237
      %v397 = vpop.permute.xlu0 %396
      %400 = vset.pattern.permute.xlu0 0
      %401 = vperm.xlu0 %400, %v238
      %v402 = vpop.permute.xlu0 %401
      %405 = vset.pattern.permute.xlu0 0
      %406 = vperm.xlu0 %405, %v239
      %v407 = vpop.permute.xlu0 %406
      %410 = vset.pattern.permute.xlu0 0
      %411 = vperm.xlu0 %410, %v240
      %v412 = vpop.permute.xlu0 %411
      %415 = vset.pattern.permute.xlu0 0
      %416 = vperm.xlu0 %415, %v241
      %v417 = vpop.permute.xlu0 %416
      %420 = vset.pattern.permute.xlu0 0
      %421 = vperm.xlu0 %420, %v242
      %v422 = vpop.permute.xlu0 %421
      %v424 = vlaneseq
      %v425 = vshrl.u32 %v424, 7
      %v426 = vsub.s32 0, %v425
      %v427 = vrot.slane %v243, %v426
      %v428 = vmul.f32 %v247, %v427
      %v429 = vmul.f32 %v252, %v427
      %v430 = vmul.f32 %v257, %v427
      %v431 = vmul.f32 %v262, %v427
      %v432 = vmul.f32 %v267, %v427
      %v433 = vmul.f32 %v272, %v427
      %v434 = vmul.f32 %v277, %v427
      %v435 = vmul.f32 %v282, %v427
      %v436 = vmul.f32 %v287, %v427
      %v437 = vmul.f32 %v292, %v427
      %v438 = vmul.f32 %v297, %v427
      %v439 = vmul.f32 %v302, %v427
      %v440 = vmul.f32 %v307, %v427
      %v441 = vmul.f32 %v312, %v427
      %v442 = vmul.f32 %v317, %v427
      %v443 = vmul.f32 %v322, %v427
      %v444 = vmul.f32 %v327, %v427
      %v445 = vmul.f32 %v332, %v427
      %v446 = vmul.f32 %v337, %v427
      %v447 = vmul.f32 %v342, %v427
      %v448 = vmul.f32 %v347, %v427
      %v449 = vmul.f32 %v352, %v427
      %v450 = vmul.f32 %v357, %v427
      %v451 = vmul.f32 %v362, %v427
      %v452 = vmul.f32 %v367, %v427
      %v453 = vmul.f32 %v372, %v427
      %v454 = vmul.f32 %v377, %v427
      %v455 = vmul.f32 %v382, %v427
      %v456 = vmul.f32 %v387, %v427
      %v457 = vmul.f32 %v392, %v427
      %v458 = vmul.f32 %v397, %v427
      %v459 = vmul.f32 %v402, %v427
      %v460 = vmul.f32 %v407, %v427
      %v461 = vmul.f32 %v412, %v427
      %v462 = vmul.f32 %v417, %v427
      %v463 = vmul.f32 %v422, %v427
      %v464 = vadd.f32 %v428, 0.0
      %v465 = vadd.f32 %v429, 0.0
      %v466 = vadd.f32 %v430, 0.0
      %v467 = vadd.f32 %v431, 0.0
      %v468 = vadd.f32 %v432, 0.0
      %v469 = vadd.f32 %v433, 0.0
      %v470 = vadd.f32 %v434, 0.0
      %v471 = vadd.f32 %v435, 0.0
      %v472 = vadd.f32 %v436, 0.0
      %v473 = vadd.f32 %v437, 0.0
      %v474 = vadd.f32 %v438, 0.0
      %v475 = vadd.f32 %v439, 0.0
      %v476 = vadd.f32 %v440, 0.0
      %v477 = vadd.f32 %v441, 0.0
      %v478 = vadd.f32 %v442, 0.0
      %v479 = vadd.f32 %v443, 0.0
      %v480 = vadd.f32 %v444, 0.0
      %v481 = vadd.f32 %v445, 0.0
      %v482 = vadd.f32 %v446, 0.0
      %v483 = vadd.f32 %v447, 0.0
      %v484 = vadd.f32 %v448, 0.0
      %v485 = vadd.f32 %v449, 0.0
      %v486 = vadd.f32 %v450, 0.0
      %v487 = vadd.f32 %v451, 0.0
      %v488 = vadd.f32 %v452, 0.0
      %v489 = vadd.f32 %v453, 0.0
      %v490 = vadd.f32 %v454, 0.0
      %v491 = vadd.f32 %v455, 0.0
      %v492 = vadd.f32 %v456, 0.0
      %v493 = vadd.f32 %v457, 0.0
      %v494 = vadd.f32 %v458, 0.0
      %v495 = vadd.f32 %v459, 0.0
      %v496 = vadd.f32 %v460, 0.0
      %v497 = vadd.f32 %v461, 0.0
      %v498 = vadd.f32 %v462, 0.0
      %v499 = vadd.f32 %v463, 0.0
      %v500 = vld [vmem:[%s165] sm:$0xf]
      %v501 = vld [vmem:[%s165 + $0x4] sm:$0xf]
      %v502 = vld [vmem:[%s165 + $0x8] sm:$0xf]
      %v503 = vld [vmem:[%s165 + $0xc] sm:$0xf]
      %v504 = vld [vmem:[%s165 + $0x10] sm:$0xf]
      %v505 = vld [vmem:[%s165 + $0x14] sm:$0xf]
      %v506 = vld [vmem:[%s165 + $0x18] sm:$0xf]
      %v507 = vld [vmem:[%s165 + $0x1c] sm:$0xf]
      %v508 = vld [vmem:[%s165 + $0x20] sm:$0xf]
      %v509 = vld [vmem:[%s165 + $0x24] sm:$0xf]
      %v510 = vld [vmem:[%s165 + $0x28] sm:$0xf]
      %v511 = vld [vmem:[%s165 + $0x2c] sm:$0xf]
      %v512 = vld [vmem:[%s165 + $0x30] sm:$0xf]
      %v513 = vld [vmem:[%s165 + $0x34] sm:$0xf]
      %v514 = vld [vmem:[%s165 + $0x38] sm:$0xf]
      %v515 = vld [vmem:[%s165 + $0x3c] sm:$0xf]
      %v516 = vld [vmem:[%s165 + $0x40] sm:$0xf]
      %v517 = vld [vmem:[%s165 + $0x44] sm:$0xf]
      %v518 = vld [vmem:[%s165 + $0x48] sm:$0xf]
      %v519 = vld [vmem:[%s165 + $0x4c] sm:$0xf]
      %v520 = vld [vmem:[%s165 + $0x50] sm:$0xf]
      %v521 = vld [vmem:[%s165 + $0x54] sm:$0xf]
      %v522 = vld [vmem:[%s165 + $0x58] sm:$0xf]
      %v523 = vld [vmem:[%s165 + $0x5c] sm:$0xf]
      %v524 = vld [vmem:[%s165 + $0x60] sm:$0xf]
      %v525 = vld [vmem:[%s165 + $0x64] sm:$0xf]
      %v526 = vld [vmem:[%s165 + $0x68] sm:$0xf]
      %v527 = vld [vmem:[%s165 + $0x6c] sm:$0xf]
      %v528 = vld [vmem:[%s165 + $0x70] sm:$0xf]
      %v529 = vld [vmem:[%s165 + $0x74] sm:$0xf]
      %v530 = vld [vmem:[%s165 + $0x78] sm:$0xf]
      %v531 = vld [vmem:[%s165 + $0x7c] sm:$0xf]
      %v532 = vld [vmem:[%s165 + $0x80] sm:$0xf]
      %v533 = vld [vmem:[%s165 + $0x84] sm:$0xf]
      %v534 = vld [vmem:[%s165 + $0x88] sm:$0xf]
      %v535 = vld [vmem:[%s165 + $0x8c] sm:$0xf]
      %v536 = vld [vmem:[%s165 + $0x90] sm:$0x1]
      %v537 = vunpack.c.l.bf16 %v500
      %v538 = vunpack.c.l.bf16 %v501
      %v539 = vunpack.c.l.bf16 %v502
      %v540 = vunpack.c.l.bf16 %v503
      %v541 = vunpack.c.l.bf16 %v504
      %v542 = vunpack.c.l.bf16 %v505
      %v543 = vunpack.c.l.bf16 %v506
      %v544 = vunpack.c.l.bf16 %v507
      %v545 = vunpack.c.l.bf16 %v508
      %v546 = vunpack.c.l.bf16 %v509
      %v547 = vunpack.c.l.bf16 %v510
      %v548 = vunpack.c.l.bf16 %v511
      %v549 = vunpack.c.l.bf16 %v512
      %v550 = vunpack.c.l.bf16 %v513
      %v551 = vunpack.c.l.bf16 %v514
      %v552 = vunpack.c.l.bf16 %v515
      %v553 = vunpack.c.l.bf16 %v516
      %v554 = vunpack.c.l.bf16 %v517
      %v555 = vunpack.c.l.bf16 %v518
      %v556 = vunpack.c.l.bf16 %v519
      %v557 = vunpack.c.l.bf16 %v520
      %v558 = vunpack.c.l.bf16 %v521
      %v559 = vunpack.c.l.bf16 %v522
      %v560 = vunpack.c.l.bf16 %v523
      %v561 = vunpack.c.l.bf16 %v524
      %v562 = vunpack.c.l.bf16 %v525
      %v563 = vunpack.c.l.bf16 %v526
      %v564 = vunpack.c.l.bf16 %v527
      %v565 = vunpack.c.l.bf16 %v528
      %v566 = vunpack.c.l.bf16 %v529
      %v567 = vunpack.c.l.bf16 %v530
      %v568 = vunpack.c.l.bf16 %v531
      %v569 = vunpack.c.l.bf16 %v532
      %v570 = vunpack.c.l.bf16 %v533
      %v571 = vunpack.c.l.bf16 %v534
      %v572 = vunpack.c.l.bf16 %v535
      %v573 = vunpack.c.l.bf16 %v536
      %v574 = vld [vmem:[%s1 + $0x1] sm:$0x1]
      %576 = vset.pattern.permute.xlu0 0
      %577 = vperm.xlu0 %576, %v537
      %v578 = vpop.permute.xlu0 %577
      %581 = vset.pattern.permute.xlu0 0
      %582 = vperm.xlu0 %581, %v538
      %v583 = vpop.permute.xlu0 %582
      %586 = vset.pattern.permute.xlu0 0
      %587 = vperm.xlu0 %586, %v539
      %v588 = vpop.permute.xlu0 %587
      %591 = vset.pattern.permute.xlu0 0
      %592 = vperm.xlu0 %591, %v540
      %v593 = vpop.permute.xlu0 %592
      %596 = vset.pattern.permute.xlu0 0
      %597 = vperm.xlu0 %596, %v541
      %v598 = vpop.permute.xlu0 %597
      %601 = vset.pattern.permute.xlu0 0
      %602 = vperm.xlu0 %601, %v542
      %v603 = vpop.permute.xlu0 %602
      %606 = vset.pattern.permute.xlu0 0
      %607 = vperm.xlu0 %606, %v543
      %v608 = vpop.permute.xlu0 %607
      %611 = vset.pattern.permute.xlu0 0
      %612 = vperm.xlu0 %611, %v544
      %v613 = vpop.permute.xlu0 %612
      %616 = vset.pattern.permute.xlu0 0
      %617 = vperm.xlu0 %616, %v545
      %v618 = vpop.permute.xlu0 %617
      %621 = vset.pattern.permute.xlu0 0
      %622 = vperm.xlu0 %621, %v546
      %v623 = vpop.permute.xlu0 %622
      %626 = vset.pattern.permute.xlu0 0
      %627 = vperm.xlu0 %626, %v547
      %v628 = vpop.permute.xlu0 %627
      %631 = vset.pattern.permute.xlu0 0
      %632 = vperm.xlu0 %631, %v548
      %v633 = vpop.permute.xlu0 %632
      %636 = vset.pattern.permute.xlu0 0
      %637 = vperm.xlu0 %636, %v549
      %v638 = vpop.permute.xlu0 %637
      %641 = vset.pattern.permute.xlu0 0
      %642 = vperm.xlu0 %641, %v550
      %v643 = vpop.permute.xlu0 %642
      %646 = vset.pattern.permute.xlu0 0
      %647 = vperm.xlu0 %646, %v551
      %v648 = vpop.permute.xlu0 %647
      %651 = vset.pattern.permute.xlu0 0
      %652 = vperm.xlu0 %651, %v552
      %v653 = vpop.permute.xlu0 %652
      %656 = vset.pattern.permute.xlu0 0
      %657 = vperm.xlu0 %656, %v553
      %v658 = vpop.permute.xlu0 %657
      %661 = vset.pattern.permute.xlu0 0
      %662 = vperm.xlu0 %661, %v554
      %v663 = vpop.permute.xlu0 %662
      %666 = vset.pattern.permute.xlu0 0
      %667 = vperm.xlu0 %666, %v555
      %v668 = vpop.permute.xlu0 %667
      %671 = vset.pattern.permute.xlu0 0
      %672 = vperm.xlu0 %671, %v556
      %v673 = vpop.permute.xlu0 %672
      %676 = vset.pattern.permute.xlu0 0
      %677 = vperm.xlu0 %676, %v557
      %v678 = vpop.permute.xlu0 %677
      %681 = vset.pattern.permute.xlu0 0
      %682 = vperm.xlu0 %681, %v558
      %v683 = vpop.permute.xlu0 %682
      %686 = vset.pattern.permute.xlu0 0
      %687 = vperm.xlu0 %686, %v559
      %v688 = vpop.permute.xlu0 %687
      %691 = vset.pattern.permute.xlu0 0
      %692 = vperm.xlu0 %691, %v560
      %v693 = vpop.permute.xlu0 %692
      %696 = vset.pattern.permute.xlu0 0
      %697 = vperm.xlu0 %696, %v561
      %v698 = vpop.permute.xlu0 %697
      %701 = vset.pattern.permute.xlu0 0
      %702 = vperm.xlu0 %701, %v562
      %v703 = vpop.permute.xlu0 %702
      %706 = vset.pattern.permute.xlu0 0
      %707 = vperm.xlu0 %706, %v563
      %v708 = vpop.permute.xlu0 %707
      %711 = vset.pattern.permute.xlu0 0
      %712 = vperm.xlu0 %711, %v564
      %v713 = vpop.permute.xlu0 %712
      %716 = vset.pattern.permute.xlu0 0
      %717 = vperm.xlu0 %716, %v565
      %v718 = vpop.permute.xlu0 %717
      %721 = vset.pattern.permute.xlu0 0
      %722 = vperm.xlu0 %721, %v566
      %v723 = vpop.permute.xlu0 %722
      %726 = vset.pattern.permute.xlu0 0
      %727 = vperm.xlu0 %726, %v567
      %v728 = vpop.permute.xlu0 %727
      %731 = vset.pattern.permute.xlu0 0
      %732 = vperm.xlu0 %731, %v568
      %v733 = vpop.permute.xlu0 %732
      %736 = vset.pattern.permute.xlu0 0
      %737 = vperm.xlu0 %736, %v569
      %v738 = vpop.permute.xlu0 %737
      %741 = vset.pattern.permute.xlu0 0
      %742 = vperm.xlu0 %741, %v570
      %v743 = vpop.permute.xlu0 %742
      %746 = vset.pattern.permute.xlu0 0
      %747 = vperm.xlu0 %746, %v571
      %v748 = vpop.permute.xlu0 %747
      %751 = vset.pattern.permute.xlu0 0
      %752 = vperm.xlu0 %751, %v572
      %v753 = vpop.permute.xlu0 %752
      %756 = vset.pattern.permute.xlu0 0
      %757 = vperm.xlu0 %756, %v573
      %v758 = vpop.permute.xlu0 %757
      %v760 = vlaneseq
      %v761 = vshrl.u32 %v760, 7
      %v762 = vsub.s32 0, %v761
      %v763 = vrot.slane %v574, %v762
      %v764 = vmul.f32 %v578, %v763
      %v765 = vmul.f32 %v583, %v763
      %v766 = vmul.f32 %v588, %v763
      %v767 = vmul.f32 %v593, %v763
      %v768 = vmul.f32 %v598, %v763
      %v769 = vmul.f32 %v603, %v763
      %v770 = vmul.f32 %v608, %v763
      %v771 = vmul.f32 %v613, %v763
      %v772 = vmul.f32 %v618, %v763
      %v773 = vmul.f32 %v623, %v763
      %v774 = vmul.f32 %v628, %v763
      %v775 = vmul.f32 %v633, %v763
      %v776 = vmul.f32 %v638, %v763
      %v777 = vmul.f32 %v643, %v763
      %v778 = vmul.f32 %v648, %v763
      %v779 = vmul.f32 %v653, %v763
      %v780 = vmul.f32 %v658, %v763
      %v781 = vmul.f32 %v663, %v763
      %v782 = vmul.f32 %v668, %v763
      %v783 = vmul.f32 %v673, %v763
      %v784 = vmul.f32 %v678, %v763
      %v785 = vmul.f32 %v683, %v763
      %v786 = vmul.f32 %v688, %v763
      %v787 = vmul.f32 %v693, %v763
      %v788 = vmul.f32 %v698, %v763
      %v789 = vmul.f32 %v703, %v763
      %v790 = vmul.f32 %v708, %v763
      %v791 = vmul.f32 %v713, %v763
      %v792 = vmul.f32 %v718, %v763
      %v793 = vmul.f32 %v723, %v763
      %v794 = vmul.f32 %v728, %v763
      %v795 = vmul.f32 %v733, %v763
      %v796 = vmul.f32 %v738, %v763
      %v797 = vmul.f32 %v743, %v763
      %v798 = vmul.f32 %v748, %v763
      %v799 = vmul.f32 %v753, %v763
      %v800 = vmul.f32 %v758, %v763
      %vm838 = vcmask 1046528
      %v839 = vrot.slane %v764, 1
      %v840 = vrot.slane %v765, 1
      %v841 = vsel %vm838, %v839, %v840
      %v842 = vrot.slane %v766, 1
      %v843 = vsel %vm838, %v840, %v842
      %v844 = vrot.slane %v767, 1
      %v845 = vsel %vm838, %v842, %v844
      %v846 = vrot.slane %v768, 1
      %v847 = vsel %vm838, %v844, %v846
      %v848 = vrot.slane %v769, 1
      %v849 = vsel %vm838, %v846, %v848
      %v850 = vrot.slane %v770, 1
      %v851 = vsel %vm838, %v848, %v850
      %v852 = vrot.slane %v771, 1
      %v853 = vsel %vm838, %v850, %v852
      %v854 = vrot.slane %v772, 1
      %v855 = vsel %vm838, %v852, %v854
      %v856 = vrot.slane %v773, 1
      %v857 = vsel %vm838, %v854, %v856
      %v858 = vrot.slane %v774, 1
      %v859 = vsel %vm838, %v856, %v858
      %v860 = vrot.slane %v775, 1
      %v861 = vsel %vm838, %v858, %v860
      %v862 = vrot.slane %v776, 1
      %v863 = vsel %vm838, %v860, %v862
      %v864 = vrot.slane %v777, 1
      %v865 = vsel %vm838, %v862, %v864
      %v866 = vrot.slane %v778, 1
      %v867 = vsel %vm838, %v864, %v866
      %v868 = vrot.slane %v779, 1
      %v869 = vsel %vm838, %v866, %v868
      %v870 = vrot.slane %v780, 1
      %v871 = vsel %vm838, %v868, %v870
      %v872 = vrot.slane %v781, 1
      %v873 = vsel %vm838, %v870, %v872
      %v874 = vrot.slane %v782, 1
      %v875 = vsel %vm838, %v872, %v874
      %v876 = vrot.slane %v783, 1
      %v877 = vsel %vm838, %v874, %v876
      %v878 = vrot.slane %v784, 1
      %v879 = vsel %vm838, %v876, %v878
      %v880 = vrot.slane %v785, 1
      %v881 = vsel %vm838, %v878, %v880
      %v882 = vrot.slane %v786, 1
      %v883 = vsel %vm838, %v880, %v882
      %v884 = vrot.slane %v787, 1
      %v885 = vsel %vm838, %v882, %v884
      %v886 = vrot.slane %v788, 1
      %v887 = vsel %vm838, %v884, %v886
      %v888 = vrot.slane %v789, 1
      %v889 = vsel %vm838, %v886, %v888
      %v890 = vrot.slane %v790, 1
      %v891 = vsel %vm838, %v888, %v890
      %v892 = vrot.slane %v791, 1
      %v893 = vsel %vm838, %v890, %v892
      %v894 = vrot.slane %v792, 1
      %v895 = vsel %vm838, %v892, %v894
      %v896 = vrot.slane %v793, 1
      %v897 = vsel %vm838, %v894, %v896
      %v898 = vrot.slane %v794, 1
      %v899 = vsel %vm838, %v896, %v898
      %v900 = vrot.slane %v795, 1
      %v901 = vsel %vm838, %v898, %v900
      %v902 = vrot.slane %v796, 1
      %v903 = vsel %vm838, %v900, %v902
      %v904 = vrot.slane %v797, 1
      %v905 = vsel %vm838, %v902, %v904
      %v906 = vrot.slane %v798, 1
      %v907 = vsel %vm838, %v904, %v906
      %v908 = vrot.slane %v799, 1
      %v909 = vsel %vm838, %v906, %v908
      %v910 = vrot.slane %v800, 1
      %v911 = vsel %vm838, %v908, %v910
      %v948 = vadd.f32 %v464, %v841
      %v949 = vadd.f32 %v465, %v843
      %v950 = vadd.f32 %v466, %v845
      %v951 = vadd.f32 %v467, %v847
      %v952 = vadd.f32 %v468, %v849
      %v953 = vadd.f32 %v469, %v851
      %v954 = vadd.f32 %v470, %v853
      %v955 = vadd.f32 %v471, %v855
      %v956 = vadd.f32 %v472, %v857
      %v957 = vadd.f32 %v473, %v859
      %v958 = vadd.f32 %v474, %v861
      %v959 = vadd.f32 %v475, %v863
      %v960 = vadd.f32 %v476, %v865
      %v961 = vadd.f32 %v477, %v867
      %v962 = vadd.f32 %v478, %v869
      %v963 = vadd.f32 %v479, %v871
      %v964 = vadd.f32 %v480, %v873
      %v965 = vadd.f32 %v481, %v875
      %v966 = vadd.f32 %v482, %v877
      %v967 = vadd.f32 %v483, %v879
      %v968 = vadd.f32 %v484, %v881
      %v969 = vadd.f32 %v485, %v883
      %v970 = vadd.f32 %v486, %v885
      %v971 = vadd.f32 %v487, %v887
      %v972 = vadd.f32 %v488, %v889
      %v973 = vadd.f32 %v489, %v891
      %v974 = vadd.f32 %v490, %v893
      %v975 = vadd.f32 %v491, %v895
      %v976 = vadd.f32 %v492, %v897
      %v977 = vadd.f32 %v493, %v899
      %v978 = vadd.f32 %v494, %v901
      %v979 = vadd.f32 %v495, %v903
      %v980 = vadd.f32 %v496, %v905
      %v981 = vadd.f32 %v497, %v907
      %v982 = vadd.f32 %v498, %v909
      %v983 = vadd.f32 %v499, %v911
      %v984 = vld [vmem:[%s165] sm:$0xe]
      %v985 = vunpack.c.l.bf16 %v984
      %v986 = vld [vmem:[%s1 + $0x2] sm:$0x1]
      %988 = vset.pattern.permute.xlu0 0
      %989 = vperm.xlu0 %988, %v985
      %v990 = vpop.permute.xlu0 %989
      %v992 = vlaneseq
      %v993 = vshrl.u32 %v992, 7
      %v994 = vsub.s32 0, %v993
      %v995 = vrot.slane %v986, %v994
      %v996 = vmul.f32 %v990, %v995
      %v997 = vmul.f32 %v583, %v995
      %v998 = vmul.f32 %v588, %v995
      %v999 = vmul.f32 %v593, %v995
      %v1000 = vmul.f32 %v598, %v995
      %v1001 = vmul.f32 %v603, %v995
      %v1002 = vmul.f32 %v608, %v995
      %v1003 = vmul.f32 %v613, %v995
      %v1004 = vmul.f32 %v618, %v995
      %v1005 = vmul.f32 %v623, %v995
      %v1006 = vmul.f32 %v628, %v995
      %v1007 = vmul.f32 %v633, %v995
      %v1008 = vmul.f32 %v638, %v995
      %v1009 = vmul.f32 %v643, %v995
      %v1010 = vmul.f32 %v648, %v995
      %v1011 = vmul.f32 %v653, %v995
      %v1012 = vmul.f32 %v658, %v995
      %v1013 = vmul.f32 %v663, %v995
      %v1014 = vmul.f32 %v668, %v995
      %v1015 = vmul.f32 %v673, %v995
      %v1016 = vmul.f32 %v678, %v995
      %v1017 = vmul.f32 %v683, %v995
      %v1018 = vmul.f32 %v688, %v995
      %v1019 = vmul.f32 %v693, %v995
      %v1020 = vmul.f32 %v698, %v995
      %v1021 = vmul.f32 %v703, %v995
      %v1022 = vmul.f32 %v708, %v995
      %v1023 = vmul.f32 %v713, %v995
      %v1024 = vmul.f32 %v718, %v995
      %v1025 = vmul.f32 %v723, %v995
      %v1026 = vmul.f32 %v728, %v995
      %v1027 = vmul.f32 %v733, %v995
      %v1028 = vmul.f32 %v738, %v995
      %v1029 = vmul.f32 %v743, %v995
      %v1030 = vmul.f32 %v748, %v995
      %v1031 = vmul.f32 %v753, %v995
      %v1032 = vmul.f32 %v758, %v995
      %vm1070 = vcmask 1045504
      %v1071 = vrot.slane %v996, 2
      %v1072 = vrot.slane %v997, 2
      %v1073 = vsel %vm1070, %v1071, %v1072
      %v1074 = vrot.slane %v998, 2
      %v1075 = vsel %vm1070, %v1072, %v1074
      %v1076 = vrot.slane %v999, 2
      %v1077 = vsel %vm1070, %v1074, %v1076
      %v1078 = vrot.slane %v1000, 2
      %v1079 = vsel %vm1070, %v1076, %v1078
      %v1080 = vrot.slane %v1001, 2
      %v1081 = vsel %vm1070, %v1078, %v1080
      %v1082 = vrot.slane %v1002, 2
      %v1083 = vsel %vm1070, %v1080, %v1082
      %v1084 = vrot.slane %v1003, 2
      %v1085 = vsel %vm1070, %v1082, %v1084
      %v1086 = vrot.slane %v1004, 2
      %v1087 = vsel %vm1070, %v1084, %v1086
      %v1088 = vrot.slane %v1005, 2
      %v1089 = vsel %vm1070, %v1086, %v1088
      %v1090 = vrot.slane %v1006, 2
      %v1091 = vsel %vm1070, %v1088, %v1090
      %v1092 = vrot.slane %v1007, 2
      %v1093 = vsel %vm1070, %v1090, %v1092
      %v1094 = vrot.slane %v1008, 2
      %v1095 = vsel %vm1070, %v1092, %v1094
      %v1096 = vrot.slane %v1009, 2
      %v1097 = vsel %vm1070, %v1094, %v1096
      %v1098 = vrot.slane %v1010, 2
      %v1099 = vsel %vm1070, %v1096, %v1098
      %v1100 = vrot.slane %v1011, 2
      %v1101 = vsel %vm1070, %v1098, %v1100
      %v1102 = vrot.slane %v1012, 2
      %v1103 = vsel %vm1070, %v1100, %v1102
      %v1104 = vrot.slane %v1013, 2
      %v1105 = vsel %vm1070, %v1102, %v1104
      %v1106 = vrot.slane %v1014, 2
      %v1107 = vsel %vm1070, %v1104, %v1106
      %v1108 = vrot.slane %v1015, 2
      %v1109 = vsel %vm1070, %v1106, %v1108
      %v1110 = vrot.slane %v1016, 2
      %v1111 = vsel %vm1070, %v1108, %v1110
      %v1112 = vrot.slane %v1017, 2
      %v1113 = vsel %vm1070, %v1110, %v1112
      %v1114 = vrot.slane %v1018, 2
      %v1115 = vsel %vm1070, %v1112, %v1114
      %v1116 = vrot.slane %v1019, 2
      %v1117 = vsel %vm1070, %v1114, %v1116
      %v1118 = vrot.slane %v1020, 2
      %v1119 = vsel %vm1070, %v1116, %v1118
      %v1120 = vrot.slane %v1021, 2
      %v1121 = vsel %vm1070, %v1118, %v1120
      %v1122 = vrot.slane %v1022, 2
      %v1123 = vsel %vm1070, %v1120, %v1122
      %v1124 = vrot.slane %v1023, 2
      %v1125 = vsel %vm1070, %v1122, %v1124
      %v1126 = vrot.slane %v1024, 2
      %v1127 = vsel %vm1070, %v1124, %v1126
      %v1128 = vrot.slane %v1025, 2
      %v1129 = vsel %vm1070, %v1126, %v1128
      %v1130 = vrot.slane %v1026, 2
      %v1131 = vsel %vm1070, %v1128, %v1130
      %v1132 = vrot.slane %v1027, 2
      %v1133 = vsel %vm1070, %v1130, %v1132
      %v1134 = vrot.slane %v1028, 2
      %v1135 = vsel %vm1070, %v1132, %v1134
      %v1136 = vrot.slane %v1029, 2
      %v1137 = vsel %vm1070, %v1134, %v1136
      %v1138 = vrot.slane %v1030, 2
      %v1139 = vsel %vm1070, %v1136, %v1138
      %v1140 = vrot.slane %v1031, 2
      %v1141 = vsel %vm1070, %v1138, %v1140
      %v1142 = vrot.slane %v1032, 2
      %v1143 = vsel %vm1070, %v1140, %v1142
      %v1180 = vadd.f32 %v948, %v1073
      %v1181 = vadd.f32 %v949, %v1075
      %v1182 = vadd.f32 %v950, %v1077
      %v1183 = vadd.f32 %v951, %v1079
      %v1184 = vadd.f32 %v952, %v1081
      %v1185 = vadd.f32 %v953, %v1083
      %v1186 = vadd.f32 %v954, %v1085
      %v1187 = vadd.f32 %v955, %v1087
      %v1188 = vadd.f32 %v956, %v1089
      %v1189 = vadd.f32 %v957, %v1091
      %v1190 = vadd.f32 %v958, %v1093
      %v1191 = vadd.f32 %v959, %v1095
      %v1192 = vadd.f32 %v960, %v1097
      %v1193 = vadd.f32 %v961, %v1099
      %v1194 = vadd.f32 %v962, %v1101
      %v1195 = vadd.f32 %v963, %v1103
      %v1196 = vadd.f32 %v964, %v1105
      %v1197 = vadd.f32 %v965, %v1107
      %v1198 = vadd.f32 %v966, %v1109
      %v1199 = vadd.f32 %v967, %v1111
      %v1200 = vadd.f32 %v968, %v1113
      %v1201 = vadd.f32 %v969, %v1115
      %v1202 = vadd.f32 %v970, %v1117
      %v1203 = vadd.f32 %v971, %v1119
      %v1204 = vadd.f32 %v972, %v1121
      %v1205 = vadd.f32 %v973, %v1123
      %v1206 = vadd.f32 %v974, %v1125
      %v1207 = vadd.f32 %v975, %v1127
      %v1208 = vadd.f32 %v976, %v1129
      %v1209 = vadd.f32 %v977, %v1131
      %v1210 = vadd.f32 %v978, %v1133
      %v1211 = vadd.f32 %v979, %v1135
      %v1212 = vadd.f32 %v980, %v1137
      %v1213 = vadd.f32 %v981, %v1139
      %v1214 = vadd.f32 %v982, %v1141
      %v1215 = vadd.f32 %v983, %v1143
      %v1216 = vld [vmem:[%s165 + $0x8] sm:$0xe]
      %v1217 = vld [vmem:[%s165 + $0xc] sm:$0xf]
      %v1218 = vld [vmem:[%s165 + $0x10] sm:$0xf]
      %v1219 = vld [vmem:[%s165 + $0x14] sm:$0xf]
      %v1220 = vld [vmem:[%s165 + $0x18] sm:$0xf]
      %v1221 = vld [vmem:[%s165 + $0x1c] sm:$0xf]
      %v1222 = vld [vmem:[%s165 + $0x20] sm:$0xf]
      %v1223 = vld [vmem:[%s165 + $0x24] sm:$0xf]
      %v1224 = vld [vmem:[%s165 + $0x28] sm:$0xf]
      %v1225 = vld [vmem:[%s165 + $0x2c] sm:$0xf]
      %v1226 = vld [vmem:[%s165 + $0x30] sm:$0xf]
      %v1227 = vld [vmem:[%s165 + $0x34] sm:$0xf]
      %v1228 = vld [vmem:[%s165 + $0x38] sm:$0xf]
      %v1229 = vld [vmem:[%s165 + $0x3c] sm:$0xf]
      %v1230 = vld [vmem:[%s165 + $0x40] sm:$0xf]
      %v1231 = vld [vmem:[%s165 + $0x44] sm:$0xf]
      %v1232 = vld [vmem:[%s165 + $0x48] sm:$0xf]
      %v1233 = vld [vmem:[%s165 + $0x4c] sm:$0xf]
      %v1234 = vld [vmem:[%s165 + $0x50] sm:$0xf]
      %v1235 = vld [vmem:[%s165 + $0x54] sm:$0xf]
      %v1236 = vld [vmem:[%s165 + $0x58] sm:$0xf]
      %v1237 = vld [vmem:[%s165 + $0x5c] sm:$0xf]
      %v1238 = vld [vmem:[%s165 + $0x60] sm:$0xf]
      %v1239 = vld [vmem:[%s165 + $0x64] sm:$0xf]
      %v1240 = vld [vmem:[%s165 + $0x68] sm:$0xf]
      %v1241 = vld [vmem:[%s165 + $0x6c] sm:$0xf]
      %v1242 = vld [vmem:[%s165 + $0x70] sm:$0xf]
      %v1243 = vld [vmem:[%s165 + $0x74] sm:$0xf]
      %v1244 = vld [vmem:[%s165 + $0x78] sm:$0xf]
      %v1245 = vld [vmem:[%s165 + $0x7c] sm:$0xf]
      %v1246 = vld [vmem:[%s165 + $0x80] sm:$0xf]
      %v1247 = vld [vmem:[%s165 + $0x84] sm:$0xf]
      %v1248 = vld [vmem:[%s165 + $0x88] sm:$0xf]
      %v1249 = vld [vmem:[%s165 + $0x8c] sm:$0xf]
      %v1250 = vld [vmem:[%s165 + $0x90] sm:$0xf]
      %v1251 = vld [vmem:[%s165 + $0x94] sm:$0xf]
      %v1252 = vld [vmem:[%s165 + $0x98] sm:$0x1]
      %v1253 = vunpack.c.l.bf16 %v1216
      %v1254 = vunpack.c.l.bf16 %v1217
      %v1255 = vunpack.c.l.bf16 %v1218
      %v1256 = vunpack.c.l.bf16 %v1219
      %v1257 = vunpack.c.l.bf16 %v1220
      %v1258 = vunpack.c.l.bf16 %v1221
      %v1259 = vunpack.c.l.bf16 %v1222
      %v1260 = vunpack.c.l.bf16 %v1223
      %v1261 = vunpack.c.l.bf16 %v1224
      %v1262 = vunpack.c.l.bf16 %v1225
      %v1263 = vunpack.c.l.bf16 %v1226
      %v1264 = vunpack.c.l.bf16 %v1227
      %v1265 = vunpack.c.l.bf16 %v1228
      %v1266 = vunpack.c.l.bf16 %v1229
      %v1267 = vunpack.c.l.bf16 %v1230
      %v1268 = vunpack.c.l.bf16 %v1231
      %v1269 = vunpack.c.l.bf16 %v1232
      %v1270 = vunpack.c.l.bf16 %v1233
      %v1271 = vunpack.c.l.bf16 %v1234
      %v1272 = vunpack.c.l.bf16 %v1235
      %v1273 = vunpack.c.l.bf16 %v1236
      %v1274 = vunpack.c.l.bf16 %v1237
      %v1275 = vunpack.c.l.bf16 %v1238
      %v1276 = vunpack.c.l.bf16 %v1239
      %v1277 = vunpack.c.l.bf16 %v1240
      %v1278 = vunpack.c.l.bf16 %v1241
      %v1279 = vunpack.c.l.bf16 %v1242
      %v1280 = vunpack.c.l.bf16 %v1243
      %v1281 = vunpack.c.l.bf16 %v1244
      %v1282 = vunpack.c.l.bf16 %v1245
      %v1283 = vunpack.c.l.bf16 %v1246
      %v1284 = vunpack.c.l.bf16 %v1247
      %v1285 = vunpack.c.l.bf16 %v1248
      %v1286 = vunpack.c.l.bf16 %v1249
      %v1287 = vunpack.c.l.bf16 %v1250
      %v1288 = vunpack.c.l.bf16 %v1251
      %v1289 = vunpack.c.l.bf16 %v1252
      %v1290 = vld [vmem:[%s1 + $0x3] sm:$0x1]
      %1292 = vset.pattern.permute.xlu0 0
      %1293 = vperm.xlu0 %1292, %v1253
      %v1294 = vpop.permute.xlu0 %1293
      %1297 = vset.pattern.permute.xlu0 0
      %1298 = vperm.xlu0 %1297, %v1254
      %v1299 = vpop.permute.xlu0 %1298
      %1302 = vset.pattern.permute.xlu0 0
      %1303 = vperm.xlu0 %1302, %v1255
      %v1304 = vpop.permute.xlu0 %1303
      %1307 = vset.pattern.permute.xlu0 0
      %1308 = vperm.xlu0 %1307, %v1256
      %v1309 = vpop.permute.xlu0 %1308
      %1312 = vset.pattern.permute.xlu0 0
      %1313 = vperm.xlu0 %1312, %v1257
      %v1314 = vpop.permute.xlu0 %1313
      %1317 = vset.pattern.permute.xlu0 0
      %1318 = vperm.xlu0 %1317, %v1258
      %v1319 = vpop.permute.xlu0 %1318
      %1322 = vset.pattern.permute.xlu0 0
      %1323 = vperm.xlu0 %1322, %v1259
      %v1324 = vpop.permute.xlu0 %1323
      %1327 = vset.pattern.permute.xlu0 0
      %1328 = vperm.xlu0 %1327, %v1260
      %v1329 = vpop.permute.xlu0 %1328
      %1332 = vset.pattern.permute.xlu0 0
      %1333 = vperm.xlu0 %1332, %v1261
      %v1334 = vpop.permute.xlu0 %1333
      %1337 = vset.pattern.permute.xlu0 0
      %1338 = vperm.xlu0 %1337, %v1262
      %v1339 = vpop.permute.xlu0 %1338
      %1342 = vset.pattern.permute.xlu0 0
      %1343 = vperm.xlu0 %1342, %v1263
      %v1344 = vpop.permute.xlu0 %1343
      %1347 = vset.pattern.permute.xlu0 0
      %1348 = vperm.xlu0 %1347, %v1264
      %v1349 = vpop.permute.xlu0 %1348
      %1352 = vset.pattern.permute.xlu0 0
      %1353 = vperm.xlu0 %1352, %v1265
      %v1354 = vpop.permute.xlu0 %1353
      %1357 = vset.pattern.permute.xlu0 0
      %1358 = vperm.xlu0 %1357, %v1266
      %v1359 = vpop.permute.xlu0 %1358
      %1362 = vset.pattern.permute.xlu0 0
      %1363 = vperm.xlu0 %1362, %v1267
      %v1364 = vpop.permute.xlu0 %1363
      %1367 = vset.pattern.permute.xlu0 0
      %1368 = vperm.xlu0 %1367, %v1268
      %v1369 = vpop.permute.xlu0 %1368
      %1372 = vset.pattern.permute.xlu0 0
      %1373 = vperm.xlu0 %1372, %v1269
      %v1374 = vpop.permute.xlu0 %1373
      %1377 = vset.pattern.permute.xlu0 0
      %1378 = vperm.xlu0 %1377, %v1270
      %v1379 = vpop.permute.xlu0 %1378
      %1382 = vset.pattern.permute.xlu0 0
      %1383 = vperm.xlu0 %1382, %v1271
      %v1384 = vpop.permute.xlu0 %1383
      %1387 = vset.pattern.permute.xlu0 0
      %1388 = vperm.xlu0 %1387, %v1272
      %v1389 = vpop.permute.xlu0 %1388
      %1392 = vset.pattern.permute.xlu0 0
      %1393 = vperm.xlu0 %1392, %v1273
      %v1394 = vpop.permute.xlu0 %1393
      %1397 = vset.pattern.permute.xlu0 0
      %1398 = vperm.xlu0 %1397, %v1274
      %v1399 = vpop.permute.xlu0 %1398
      %1402 = vset.pattern.permute.xlu0 0
      %1403 = vperm.xlu0 %1402, %v1275
      %v1404 = vpop.permute.xlu0 %1403
      %1407 = vset.pattern.permute.xlu0 0
      %1408 = vperm.xlu0 %1407, %v1276
      %v1409 = vpop.permute.xlu0 %1408
      %1412 = vset.pattern.permute.xlu0 0
      %1413 = vperm.xlu0 %1412, %v1277
      %v1414 = vpop.permute.xlu0 %1413
      %1417 = vset.pattern.permute.xlu0 0
      %1418 = vperm.xlu0 %1417, %v1278
      %v1419 = vpop.permute.xlu0 %1418
      %1422 = vset.pattern.permute.xlu0 0
      %1423 = vperm.xlu0 %1422, %v1279
      %v1424 = vpop.permute.xlu0 %1423
      %1427 = vset.pattern.permute.xlu0 0
      %1428 = vperm.xlu0 %1427, %v1280
      %v1429 = vpop.permute.xlu0 %1428
      %1432 = vset.pattern.permute.xlu0 0
      %1433 = vperm.xlu0 %1432, %v1281
      %v1434 = vpop.permute.xlu0 %1433
      %1437 = vset.pattern.permute.xlu0 0
      %1438 = vperm.xlu0 %1437, %v1282
      %v1439 = vpop.permute.xlu0 %1438
      %1442 = vset.pattern.permute.xlu0 0
      %1443 = vperm.xlu0 %1442, %v1283
      %v1444 = vpop.permute.xlu0 %1443
      %1447 = vset.pattern.permute.xlu0 0
      %1448 = vperm.xlu0 %1447, %v1284
      %v1449 = vpop.permute.xlu0 %1448
      %1452 = vset.pattern.permute.xlu0 0
      %1453 = vperm.xlu0 %1452, %v1285
      %v1454 = vpop.permute.xlu0 %1453
      %1457 = vset.pattern.permute.xlu0 0
      %1458 = vperm.xlu0 %1457, %v1286
      %v1459 = vpop.permute.xlu0 %1458
      %1462 = vset.pattern.permute.xlu0 0
      %1463 = vperm.xlu0 %1462, %v1287
      %v1464 = vpop.permute.xlu0 %1463
      %1467 = vset.pattern.permute.xlu0 0
      %1468 = vperm.xlu0 %1467, %v1288
      %v1469 = vpop.permute.xlu0 %1468
      %1472 = vset.pattern.permute.xlu0 0
      %1473 = vperm.xlu0 %1472, %v1289
      %v1474 = vpop.permute.xlu0 %1473
      %v1476 = vlaneseq
      %v1477 = vshrl.u32 %v1476, 7
      %v1478 = vsub.s32 0, %v1477
      %v1479 = vrot.slane %v1290, %v1478
      %v1480 = vmul.f32 %v1294, %v1479
      %v1481 = vmul.f32 %v1299, %v1479
      %v1482 = vmul.f32 %v1304, %v1479
      %v1483 = vmul.f32 %v1309, %v1479
      %v1484 = vmul.f32 %v1314, %v1479
      %v1485 = vmul.f32 %v1319, %v1479
      %v1486 = vmul.f32 %v1324, %v1479
      %v1487 = vmul.f32 %v1329, %v1479
      %v1488 = vmul.f32 %v1334, %v1479
      %v1489 = vmul.f32 %v1339, %v1479
      %v1490 = vmul.f32 %v1344, %v1479
      %v1491 = vmul.f32 %v1349, %v1479
      %v1492 = vmul.f32 %v1354, %v1479
      %v1493 = vmul.f32 %v1359, %v1479
      %v1494 = vmul.f32 %v1364, %v1479
      %v1495 = vmul.f32 %v1369, %v1479
      %v1496 = vmul.f32 %v1374, %v1479
      %v1497 = vmul.f32 %v1379, %v1479
      %v1498 = vmul.f32 %v1384, %v1479
      %v1499 = vmul.f32 %v1389, %v1479
      %v1500 = vmul.f32 %v1394, %v1479
      %v1501 = vmul.f32 %v1399, %v1479
      %v1502 = vmul.f32 %v1404, %v1479
      %v1503 = vmul.f32 %v1409, %v1479
      %v1504 = vmul.f32 %v1414, %v1479
      %v1505 = vmul.f32 %v1419, %v1479
      %v1506 = vmul.f32 %v1424, %v1479
      %v1507 = vmul.f32 %v1429, %v1479
      %v1508 = vmul.f32 %v1434, %v1479
      %v1509 = vmul.f32 %v1439, %v1479
      %v1510 = vmul.f32 %v1444, %v1479
      %v1511 = vmul.f32 %v1449, %v1479
      %v1512 = vmul.f32 %v1454, %v1479
      %v1513 = vmul.f32 %v1459, %v1479
      %v1514 = vmul.f32 %v1464, %v1479
      %v1515 = vmul.f32 %v1469, %v1479
      %v1516 = vmul.f32 %v1474, %v1479
      %v1554 = vrot.slane %v1480, 2
      %v1555 = vrot.slane %v1481, 2
      %v1556 = vsel %vm1070, %v1554, %v1555
      %v1557 = vrot.slane %v1482, 2
      %v1558 = vsel %vm1070, %v1555, %v1557
      %v1559 = vrot.slane %v1483, 2
      %v1560 = vsel %vm1070, %v1557, %v1559
      %v1561 = vrot.slane %v1484, 2
      %v1562 = vsel %vm1070, %v1559, %v1561
      %v1563 = vrot.slane %v1485, 2
      %v1564 = vsel %vm1070, %v1561, %v1563
      %v1565 = vrot.slane %v1486, 2
      %v1566 = vsel %vm1070, %v1563, %v1565
      %v1567 = vrot.slane %v1487, 2
      %v1568 = vsel %vm1070, %v1565, %v1567
      %v1569 = vrot.slane %v1488, 2
      %v1570 = vsel %vm1070, %v1567, %v1569
      %v1571 = vrot.slane %v1489, 2
      %v1572 = vsel %vm1070, %v1569, %v1571
      %v1573 = vrot.slane %v1490, 2
      %v1574 = vsel %vm1070, %v1571, %v1573
      %v1575 = vrot.slane %v1491, 2
      %v1576 = vsel %vm1070, %v1573, %v1575
      %v1577 = vrot.slane %v1492, 2
      %v1578 = vsel %vm1070, %v1575, %v1577
      %v1579 = vrot.slane %v1493, 2
      %v1580 = vsel %vm1070, %v1577, %v1579
      %v1581 = vrot.slane %v1494, 2
      %v1582 = vsel %vm1070, %v1579, %v1581
      %v1583 = vrot.slane %v1495, 2
      %v1584 = vsel %vm1070, %v1581, %v1583
      %v1585 = vrot.slane %v1496, 2
      %v1586 = vsel %vm1070, %v1583, %v1585
      %v1587 = vrot.slane %v1497, 2
      %v1588 = vsel %vm1070, %v1585, %v1587
      %v1589 = vrot.slane %v1498, 2
      %v1590 = vsel %vm1070, %v1587, %v1589
      %v1591 = vrot.slane %v1499, 2
      %v1592 = vsel %vm1070, %v1589, %v1591
      %v1593 = vrot.slane %v1500, 2
      %v1594 = vsel %vm1070, %v1591, %v1593
      %v1595 = vrot.slane %v1501, 2
      %v1596 = vsel %vm1070, %v1593, %v1595
      %v1597 = vrot.slane %v1502, 2
      %v1598 = vsel %vm1070, %v1595, %v1597
      %v1599 = vrot.slane %v1503, 2
      %v1600 = vsel %vm1070, %v1597, %v1599
      %v1601 = vrot.slane %v1504, 2
      %v1602 = vsel %vm1070, %v1599, %v1601
      %v1603 = vrot.slane %v1505, 2
      %v1604 = vsel %vm1070, %v1601, %v1603
      %v1605 = vrot.slane %v1506, 2
      %v1606 = vsel %vm1070, %v1603, %v1605
      %v1607 = vrot.slane %v1507, 2
      %v1608 = vsel %vm1070, %v1605, %v1607
      %v1609 = vrot.slane %v1508, 2
      %v1610 = vsel %vm1070, %v1607, %v1609
      %v1611 = vrot.slane %v1509, 2
      %v1612 = vsel %vm1070, %v1609, %v1611
      %v1613 = vrot.slane %v1510, 2
      %v1614 = vsel %vm1070, %v1611, %v1613
      %v1615 = vrot.slane %v1511, 2
      %v1616 = vsel %vm1070, %v1613, %v1615
      %v1617 = vrot.slane %v1512, 2
      %v1618 = vsel %vm1070, %v1615, %v1617
      %v1619 = vrot.slane %v1513, 2
      %v1620 = vsel %vm1070, %v1617, %v1619
      %v1621 = vrot.slane %v1514, 2
      %v1622 = vsel %vm1070, %v1619, %v1621
      %v1623 = vrot.slane %v1515, 2
      %v1624 = vsel %vm1070, %v1621, %v1623
      %v1625 = vrot.slane %v1516, 2
      %v1626 = vsel %vm1070, %v1623, %v1625
      %v1663 = vadd.f32 %v1180, %v1556
      %v1664 = vadd.f32 %v1181, %v1558
      %v1665 = vadd.f32 %v1182, %v1560
      %v1666 = vadd.f32 %v1183, %v1562
      %v1667 = vadd.f32 %v1184, %v1564
      %v1668 = vadd.f32 %v1185, %v1566
      %v1669 = vadd.f32 %v1186, %v1568
      %v1670 = vadd.f32 %v1187, %v1570
      %v1671 = vadd.f32 %v1188, %v1572
      %v1672 = vadd.f32 %v1189, %v1574
      %v1673 = vadd.f32 %v1190, %v1576
      %v1674 = vadd.f32 %v1191, %v1578
      %v1675 = vadd.f32 %v1192, %v1580
      %v1676 = vadd.f32 %v1193, %v1582
      %v1677 = vadd.f32 %v1194, %v1584
      %v1678 = vadd.f32 %v1195, %v1586
      %v1679 = vadd.f32 %v1196, %v1588
      %v1680 = vadd.f32 %v1197, %v1590
      %v1681 = vadd.f32 %v1198, %v1592
      %v1682 = vadd.f32 %v1199, %v1594
      %v1683 = vadd.f32 %v1200, %v1596
      %v1684 = vadd.f32 %v1201, %v1598
      %v1685 = vadd.f32 %v1202, %v1600
      %v1686 = vadd.f32 %v1203, %v1602
      %v1687 = vadd.f32 %v1204, %v1604
      %v1688 = vadd.f32 %v1205, %v1606
      %v1689 = vadd.f32 %v1206, %v1608
      %v1690 = vadd.f32 %v1207, %v1610
      %v1691 = vadd.f32 %v1208, %v1612
      %v1692 = vadd.f32 %v1209, %v1614
      %v1693 = vadd.f32 %v1210, %v1616
      %v1694 = vadd.f32 %v1211, %v1618
      %v1695 = vadd.f32 %v1212, %v1620
      %v1696 = vadd.f32 %v1213, %v1622
      %v1697 = vadd.f32 %v1214, %v1624
      %v1698 = vadd.f32 %v1215, %v1626
      %v1699 = vld [vmem:[%s165 + $0x98] sm:$0x3]
      %v1700 = vunpack.c.l.bf16 %v1699
      %v1701 = vld [vmem:[%s1 + $0x4] sm:$0x1]
      %1703 = vset.pattern.permute.xlu0 0
      %1704 = vperm.xlu0 %1703, %v1700
      %v1705 = vpop.permute.xlu0 %1704
      %v1707 = vlaneseq
      %v1708 = vshrl.u32 %v1707, 7
      %v1709 = vsub.s32 0, %v1708
      %v1710 = vrot.slane %v1701, %v1709
      %v1711 = vmul.f32 %v1294, %v1710
      %v1712 = vmul.f32 %v1299, %v1710
      %v1713 = vmul.f32 %v1304, %v1710
      %v1714 = vmul.f32 %v1309, %v1710
      %v1715 = vmul.f32 %v1314, %v1710
      %v1716 = vmul.f32 %v1319, %v1710
      %v1717 = vmul.f32 %v1324, %v1710
      %v1718 = vmul.f32 %v1329, %v1710
      %v1719 = vmul.f32 %v1334, %v1710
      %v1720 = vmul.f32 %v1339, %v1710
      %v1721 = vmul.f32 %v1344, %v1710
      %v1722 = vmul.f32 %v1349, %v1710
      %v1723 = vmul.f32 %v1354, %v1710
      %v1724 = vmul.f32 %v1359, %v1710
      %v1725 = vmul.f32 %v1364, %v1710
      %v1726 = vmul.f32 %v1369, %v1710
      %v1727 = vmul.f32 %v1374, %v1710
      %v1728 = vmul.f32 %v1379, %v1710
      %v1729 = vmul.f32 %v1384, %v1710
      %v1730 = vmul.f32 %v1389, %v1710
      %v1731 = vmul.f32 %v1394, %v1710
      %v1732 = vmul.f32 %v1399, %v1710
      %v1733 = vmul.f32 %v1404, %v1710
      %v1734 = vmul.f32 %v1409, %v1710
      %v1735 = vmul.f32 %v1414, %v1710
      %v1736 = vmul.f32 %v1419, %v1710
      %v1737 = vmul.f32 %v1424, %v1710
      %v1738 = vmul.f32 %v1429, %v1710
      %v1739 = vmul.f32 %v1434, %v1710
      %v1740 = vmul.f32 %v1439, %v1710
      %v1741 = vmul.f32 %v1444, %v1710
      %v1742 = vmul.f32 %v1449, %v1710
      %v1743 = vmul.f32 %v1454, %v1710
      %v1744 = vmul.f32 %v1459, %v1710
      %v1745 = vmul.f32 %v1464, %v1710
      %v1746 = vmul.f32 %v1469, %v1710
      %v1747 = vmul.f32 %v1705, %v1710
      %vm1785 = vcmask 1044480
      %v1786 = vrot.slane %v1711, 3
      %v1787 = vrot.slane %v1712, 3
      %v1788 = vsel %vm1785, %v1786, %v1787
      %v1789 = vrot.slane %v1713, 3
      %v1790 = vsel %vm1785, %v1787, %v1789
      %v1791 = vrot.slane %v1714, 3
      %v1792 = vsel %vm1785, %v1789, %v1791
      %v1793 = vrot.slane %v1715, 3
      %v1794 = vsel %vm1785, %v1791, %v1793
      %v1795 = vrot.slane %v1716, 3
      %v1796 = vsel %vm1785, %v1793, %v1795
      %v1797 = vrot.slane %v1717, 3
      %v1798 = vsel %vm1785, %v1795, %v1797
      %v1799 = vrot.slane %v1718, 3
      %v1800 = vsel %vm1785, %v1797, %v1799
      %v1801 = vrot.slane %v1719, 3
      %v1802 = vsel %vm1785, %v1799, %v1801
      %v1803 = vrot.slane %v1720, 3
      %v1804 = vsel %vm1785, %v1801, %v1803
      %v1805 = vrot.slane %v1721, 3
      %v1806 = vsel %vm1785, %v1803, %v1805
      %v1807 = vrot.slane %v1722, 3
      %v1808 = vsel %vm1785, %v1805, %v1807
      %v1809 = vrot.slane %v1723, 3
      %v1810 = vsel %vm1785, %v1807, %v1809
      %v1811 = vrot.slane %v1724, 3
      %v1812 = vsel %vm1785, %v1809, %v1811
      %v1813 = vrot.slane %v1725, 3
      %v1814 = vsel %vm1785, %v1811, %v1813
      %v1815 = vrot.slane %v1726, 3
      %v1816 = vsel %vm1785, %v1813, %v1815
      %v1817 = vrot.slane %v1727, 3
      %v1818 = vsel %vm1785, %v1815, %v1817
      %v1819 = vrot.slane %v1728, 3
      %v1820 = vsel %vm1785, %v1817, %v1819
      %v1821 = vrot.slane %v1729, 3
      %v1822 = vsel %vm1785, %v1819, %v1821
      %v1823 = vrot.slane %v1730, 3
      %v1824 = vsel %vm1785, %v1821, %v1823
      %v1825 = vrot.slane %v1731, 3
      %v1826 = vsel %vm1785, %v1823, %v1825
      %v1827 = vrot.slane %v1732, 3
      %v1828 = vsel %vm1785, %v1825, %v1827
      %v1829 = vrot.slane %v1733, 3
      %v1830 = vsel %vm1785, %v1827, %v1829
      %v1831 = vrot.slane %v1734, 3
      %v1832 = vsel %vm1785, %v1829, %v1831
      %v1833 = vrot.slane %v1735, 3
      %v1834 = vsel %vm1785, %v1831, %v1833
      %v1835 = vrot.slane %v1736, 3
      %v1836 = vsel %vm1785, %v1833, %v1835
      %v1837 = vrot.slane %v1737, 3
      %v1838 = vsel %vm1785, %v1835, %v1837
      %v1839 = vrot.slane %v1738, 3
      %v1840 = vsel %vm1785, %v1837, %v1839
      %v1841 = vrot.slane %v1739, 3
      %v1842 = vsel %vm1785, %v1839, %v1841
      %v1843 = vrot.slane %v1740, 3
      %v1844 = vsel %vm1785, %v1841, %v1843
      %v1845 = vrot.slane %v1741, 3
      %v1846 = vsel %vm1785, %v1843, %v1845
      %v1847 = vrot.slane %v1742, 3
      %v1848 = vsel %vm1785, %v1845, %v1847
      %v1849 = vrot.slane %v1743, 3
      %v1850 = vsel %vm1785, %v1847, %v1849
      %v1851 = vrot.slane %v1744, 3
      %v1852 = vsel %vm1785, %v1849, %v1851
      %v1853 = vrot.slane %v1745, 3
      %v1854 = vsel %vm1785, %v1851, %v1853
      %v1855 = vrot.slane %v1746, 3
      %v1856 = vsel %vm1785, %v1853, %v1855
      %v1857 = vrot.slane %v1747, 3
      %v1858 = vsel %vm1785, %v1855, %v1857
      %v1895 = vadd.f32 %v1663, %v1788
      %v1896 = vadd.f32 %v1664, %v1790
      %v1897 = vadd.f32 %v1665, %v1792
      %v1898 = vadd.f32 %v1666, %v1794
      %v1899 = vadd.f32 %v1667, %v1796
      %v1900 = vadd.f32 %v1668, %v1798
      %v1901 = vadd.f32 %v1669, %v1800
      %v1902 = vadd.f32 %v1670, %v1802
      %v1903 = vadd.f32 %v1671, %v1804
      %v1904 = vadd.f32 %v1672, %v1806
      %v1905 = vadd.f32 %v1673, %v1808
      %v1906 = vadd.f32 %v1674, %v1810
      %v1907 = vadd.f32 %v1675, %v1812
      %v1908 = vadd.f32 %v1676, %v1814
      %v1909 = vadd.f32 %v1677, %v1816
      %v1910 = vadd.f32 %v1678, %v1818
      %v1911 = vadd.f32 %v1679, %v1820
      %v1912 = vadd.f32 %v1680, %v1822
      %v1913 = vadd.f32 %v1681, %v1824
      %v1914 = vadd.f32 %v1682, %v1826
      %v1915 = vadd.f32 %v1683, %v1828
      %v1916 = vadd.f32 %v1684, %v1830
      %v1917 = vadd.f32 %v1685, %v1832
      %v1918 = vadd.f32 %v1686, %v1834
      %v1919 = vadd.f32 %v1687, %v1836
      %v1920 = vadd.f32 %v1688, %v1838
      %v1921 = vadd.f32 %v1689, %v1840
      %v1922 = vadd.f32 %v1690, %v1842
      %v1923 = vadd.f32 %v1691, %v1844
      %v1924 = vadd.f32 %v1692, %v1846
      %v1925 = vadd.f32 %v1693, %v1848
      %v1926 = vadd.f32 %v1694, %v1850
      %v1927 = vadd.f32 %v1695, %v1852
      %v1928 = vadd.f32 %v1696, %v1854
      %v1929 = vadd.f32 %v1697, %v1856
      %v1930 = vadd.f32 %v1698, %v1858
      %v1931 = vld [vmem:[%s165 + $0x8] sm:$0xc]
      %v1932 = vunpack.c.l.bf16 %v1931
      %v1933 = vld [vmem:[%s1 + $0x5] sm:$0x1]
      %1935 = vset.pattern.permute.xlu0 0
      %1936 = vperm.xlu0 %1935, %v1932
      %v1937 = vpop.permute.xlu0 %1936
      %v1939 = vlaneseq
      %v1940 = vshrl.u32 %v1939, 7
      %v1941 = vsub.s32 0, %v1940
      %v1942 = vrot.slane %v1933, %v1941
      %v1943 = vmul.f32 %v1937, %v1942
      %v1944 = vmul.f32 %v1299, %v1942
      %v1945 = vmul.f32 %v1304, %v1942
      %v1946 = vmul.f32 %v1309, %v1942
      %v1947 = vmul.f32 %v1314, %v1942
      %v1948 = vmul.f32 %v1319, %v1942
      %v1949 = vmul.f32 %v1324, %v1942
      %v1950 = vmul.f32 %v1329, %v1942
      %v1951 = vmul.f32 %v1334, %v1942
      %v1952 = vmul.f32 %v1339, %v1942
      %v1953 = vmul.f32 %v1344, %v1942
      %v1954 = vmul.f32 %v1349, %v1942
      %v1955 = vmul.f32 %v1354, %v1942
      %v1956 = vmul.f32 %v1359, %v1942
      %v1957 = vmul.f32 %v1364, %v1942
      %v1958 = vmul.f32 %v1369, %v1942
      %v1959 = vmul.f32 %v1374, %v1942
      %v1960 = vmul.f32 %v1379, %v1942
      %v1961 = vmul.f32 %v1384, %v1942
      %v1962 = vmul.f32 %v1389, %v1942
      %v1963 = vmul.f32 %v1394, %v1942
      %v1964 = vmul.f32 %v1399, %v1942
      %v1965 = vmul.f32 %v1404, %v1942
      %v1966 = vmul.f32 %v1409, %v1942
      %v1967 = vmul.f32 %v1414, %v1942
      %v1968 = vmul.f32 %v1419, %v1942
      %v1969 = vmul.f32 %v1424, %v1942
      %v1970 = vmul.f32 %v1429, %v1942
      %v1971 = vmul.f32 %v1434, %v1942
      %v1972 = vmul.f32 %v1439, %v1942
      %v1973 = vmul.f32 %v1444, %v1942
      %v1974 = vmul.f32 %v1449, %v1942
      %v1975 = vmul.f32 %v1454, %v1942
      %v1976 = vmul.f32 %v1459, %v1942
      %v1977 = vmul.f32 %v1464, %v1942
      %v1978 = vmul.f32 %v1469, %v1942
      %v1979 = vmul.f32 %v1705, %v1942
      %vm2017 = vcmask 1043456
      %v2018 = vrot.slane %v1943, 4
      %v2019 = vrot.slane %v1944, 4
      %v2020 = vsel %vm2017, %v2018, %v2019
      %v2021 = vrot.slane %v1945, 4
      %v2022 = vsel %vm2017, %v2019, %v2021
      %v2023 = vrot.slane %v1946, 4
      %v2024 = vsel %vm2017, %v2021, %v2023
      %v2025 = vrot.slane %v1947, 4
      %v2026 = vsel %vm2017, %v2023, %v2025
      %v2027 = vrot.slane %v1948, 4
      %v2028 = vsel %vm2017, %v2025, %v2027
      %v2029 = vrot.slane %v1949, 4
      %v2030 = vsel %vm2017, %v2027, %v2029
      %v2031 = vrot.slane %v1950, 4
      %v2032 = vsel %vm2017, %v2029, %v2031
      %v2033 = vrot.slane %v1951, 4
      %v2034 = vsel %vm2017, %v2031, %v2033
      %v2035 = vrot.slane %v1952, 4
      %v2036 = vsel %vm2017, %v2033, %v2035
      %v2037 = vrot.slane %v1953, 4
      %v2038 = vsel %vm2017, %v2035, %v2037
      %v2039 = vrot.slane %v1954, 4
      %v2040 = vsel %vm2017, %v2037, %v2039
      %v2041 = vrot.slane %v1955, 4
      %v2042 = vsel %vm2017, %v2039, %v2041
      %v2043 = vrot.slane %v1956, 4
      %v2044 = vsel %vm2017, %v2041, %v2043
      %v2045 = vrot.slane %v1957, 4
      %v2046 = vsel %vm2017, %v2043, %v2045
      %v2047 = vrot.slane %v1958, 4
      %v2048 = vsel %vm2017, %v2045, %v2047
      %v2049 = vrot.slane %v1959, 4
      %v2050 = vsel %vm2017, %v2047, %v2049
      %v2051 = vrot.slane %v1960, 4
      %v2052 = vsel %vm2017, %v2049, %v2051
      %v2053 = vrot.slane %v1961, 4
      %v2054 = vsel %vm2017, %v2051, %v2053
      %v2055 = vrot.slane %v1962, 4
      %v2056 = vsel %vm2017, %v2053, %v2055
      %v2057 = vrot.slane %v1963, 4
      %v2058 = vsel %vm2017, %v2055, %v2057
      %v2059 = vrot.slane %v1964, 4
      %v2060 = vsel %vm2017, %v2057, %v2059
      %v2061 = vrot.slane %v1965, 4
      %v2062 = vsel %vm2017, %v2059, %v2061
      %v2063 = vrot.slane %v1966, 4
      %v2064 = vsel %vm2017, %v2061, %v2063
      %v2065 = vrot.slane %v1967, 4
      %v2066 = vsel %vm2017, %v2063, %v2065
      %v2067 = vrot.slane %v1968, 4
      %v2068 = vsel %vm2017, %v2065, %v2067
      %v2069 = vrot.slane %v1969, 4
      %v2070 = vsel %vm2017, %v2067, %v2069
      %v2071 = vrot.slane %v1970, 4
      %v2072 = vsel %vm2017, %v2069, %v2071
      %v2073 = vrot.slane %v1971, 4
      %v2074 = vsel %vm2017, %v2071, %v2073
      %v2075 = vrot.slane %v1972, 4
      %v2076 = vsel %vm2017, %v2073, %v2075
      %v2077 = vrot.slane %v1973, 4
      %v2078 = vsel %vm2017, %v2075, %v2077
      %v2079 = vrot.slane %v1974, 4
      %v2080 = vsel %vm2017, %v2077, %v2079
      %v2081 = vrot.slane %v1975, 4
      %v2082 = vsel %vm2017, %v2079, %v2081
      %v2083 = vrot.slane %v1976, 4
      %v2084 = vsel %vm2017, %v2081, %v2083
      %v2085 = vrot.slane %v1977, 4
      %v2086 = vsel %vm2017, %v2083, %v2085
      %v2087 = vrot.slane %v1978, 4
      %v2088 = vsel %vm2017, %v2085, %v2087
      %v2089 = vrot.slane %v1979, 4
      %v2090 = vsel %vm2017, %v2087, %v2089
      %v2127 = vadd.f32 %v1895, %v2020
      %v2128 = vadd.f32 %v1896, %v2022
      %v2129 = vadd.f32 %v1897, %v2024
      %v2130 = vadd.f32 %v1898, %v2026
      %v2131 = vadd.f32 %v1899, %v2028
      %v2132 = vadd.f32 %v1900, %v2030
      %v2133 = vadd.f32 %v1901, %v2032
      %v2134 = vadd.f32 %v1902, %v2034
      %v2135 = vadd.f32 %v1903, %v2036
      %v2136 = vadd.f32 %v1904, %v2038
      %v2137 = vadd.f32 %v1905, %v2040
      %v2138 = vadd.f32 %v1906, %v2042
      %v2139 = vadd.f32 %v1907, %v2044
      %v2140 = vadd.f32 %v1908, %v2046
      %v2141 = vadd.f32 %v1909, %v2048
      %v2142 = vadd.f32 %v1910, %v2050
      %v2143 = vadd.f32 %v1911, %v2052
      %v2144 = vadd.f32 %v1912, %v2054
      %v2145 = vadd.f32 %v1913, %v2056
      %v2146 = vadd.f32 %v1914, %v2058
      %v2147 = vadd.f32 %v1915, %v2060
      %v2148 = vadd.f32 %v1916, %v2062
      %v2149 = vadd.f32 %v1917, %v2064
      %v2150 = vadd.f32 %v1918, %v2066
      %v2151 = vadd.f32 %v1919, %v2068
      %v2152 = vadd.f32 %v1920, %v2070
      %v2153 = vadd.f32 %v1921, %v2072
      %v2154 = vadd.f32 %v1922, %v2074
      %v2155 = vadd.f32 %v1923, %v2076
      %v2156 = vadd.f32 %v1924, %v2078
      %v2157 = vadd.f32 %v1925, %v2080
      %v2158 = vadd.f32 %v1926, %v2082
      %v2159 = vadd.f32 %v1927, %v2084
      %v2160 = vadd.f32 %v1928, %v2086
      %v2161 = vadd.f32 %v1929, %v2088
      %v2162 = vadd.f32 %v1930, %v2090
      %v2163 = vld [vmem:[%s165 + $0x10] sm:$0xc]
      %v2164 = vld [vmem:[%s165 + $0x14] sm:$0xf]
      %v2165 = vld [vmem:[%s165 + $0x18] sm:$0xf]
      %v2166 = vld [vmem:[%s165 + $0x1c] sm:$0xf]
      %v2167 = vld [vmem:[%s165 + $0x20] sm:$0xf]
      %v2168 = vld [vmem:[%s165 + $0x24] sm:$0xf]
      %v2169 = vld [vmem:[%s165 + $0x28] sm:$0xf]
      %v2170 = vld [vmem:[%s165 + $0x2c] sm:$0xf]
      %v2171 = vld [vmem:[%s165 + $0x30] sm:$0xf]
      %v2172 = vld [vmem:[%s165 + $0x34] sm:$0xf]
      %v2173 = vld [vmem:[%s165 + $0x38] sm:$0xf]
      %v2174 = vld [vmem:[%s165 + $0x3c] sm:$0xf]
      %v2175 = vld [vmem:[%s165 + $0x40] sm:$0xf]
      %v2176 = vld [vmem:[%s165 + $0x44] sm:$0xf]
      %v2177 = vld [vmem:[%s165 + $0x48] sm:$0xf]
      %v2178 = vld [vmem:[%s165 + $0x4c] sm:$0xf]
      %v2179 = vld [vmem:[%s165 + $0x50] sm:$0xf]
      %v2180 = vld [vmem:[%s165 + $0x54] sm:$0xf]
      %v2181 = vld [vmem:[%s165 + $0x58] sm:$0xf]
      %v2182 = vld [vmem:[%s165 + $0x5c] sm:$0xf]
      %v2183 = vld [vmem:[%s165 + $0x60] sm:$0xf]
      %v2184 = vld [vmem:[%s165 + $0x64] sm:$0xf]
      %v2185 = vld [vmem:[%s165 + $0x68] sm:$0xf]
      %v2186 = vld [vmem:[%s165 + $0x6c] sm:$0xf]
      %v2187 = vld [vmem:[%s165 + $0x70] sm:$0xf]
      %v2188 = vld [vmem:[%s165 + $0x74] sm:$0xf]
      %v2189 = vld [vmem:[%s165 + $0x78] sm:$0xf]
      %v2190 = vld [vmem:[%s165 + $0x7c] sm:$0xf]
      %v2191 = vld [vmem:[%s165 + $0x80] sm:$0xf]
      %v2192 = vld [vmem:[%s165 + $0x84] sm:$0xf]
      %v2193 = vld [vmem:[%s165 + $0x88] sm:$0xf]
      %v2194 = vld [vmem:[%s165 + $0x8c] sm:$0xf]
      %v2195 = vld [vmem:[%s165 + $0x90] sm:$0xf]
      %v2196 = vld [vmem:[%s165 + $0x94] sm:$0xf]
      %v2197 = vld [vmem:[%s165 + $0x98] sm:$0xf]
      %v2198 = vld [vmem:[%s165 + $0x9c] sm:$0xf]
      %v2199 = vld [vmem:[%s165 + $0xa0] sm:$0x3]
      %v2200 = vunpack.c.l.bf16 %v2163
      %v2201 = vunpack.c.l.bf16 %v2164
      %v2202 = vunpack.c.l.bf16 %v2165
      %v2203 = vunpack.c.l.bf16 %v2166
      %v2204 = vunpack.c.l.bf16 %v2167
      %v2205 = vunpack.c.l.bf16 %v2168
      %v2206 = vunpack.c.l.bf16 %v2169
      %v2207 = vunpack.c.l.bf16 %v2170
      %v2208 = vunpack.c.l.bf16 %v2171
      %v2209 = vunpack.c.l.bf16 %v2172
      %v2210 = vunpack.c.l.bf16 %v2173
      %v2211 = vunpack.c.l.bf16 %v2174
      %v2212 = vunpack.c.l.bf16 %v2175
      %v2213 = vunpack.c.l.bf16 %v2176
      %v2214 = vunpack.c.l.bf16 %v2177
      %v2215 = vunpack.c.l.bf16 %v2178
      %v2216 = vunpack.c.l.bf16 %v2179
      %v2217 = vunpack.c.l.bf16 %v2180
      %v2218 = vunpack.c.l.bf16 %v2181
      %v2219 = vunpack.c.l.bf16 %v2182
      %v2220 = vunpack.c.l.bf16 %v2183
      %v2221 = vunpack.c.l.bf16 %v2184
      %v2222 = vunpack.c.l.bf16 %v2185
      %v2223 = vunpack.c.l.bf16 %v2186
      %v2224 = vunpack.c.l.bf16 %v2187
      %v2225 = vunpack.c.l.bf16 %v2188
      %v2226 = vunpack.c.l.bf16 %v2189
      %v2227 = vunpack.c.l.bf16 %v2190
      %v2228 = vunpack.c.l.bf16 %v2191
      %v2229 = vunpack.c.l.bf16 %v2192
      %v2230 = vunpack.c.l.bf16 %v2193
      %v2231 = vunpack.c.l.bf16 %v2194
      %v2232 = vunpack.c.l.bf16 %v2195
      %v2233 = vunpack.c.l.bf16 %v2196
      %v2234 = vunpack.c.l.bf16 %v2197
      %v2235 = vunpack.c.l.bf16 %v2198
      %v2236 = vunpack.c.l.bf16 %v2199
      %v2237 = vld [vmem:[%s1 + $0x6] sm:$0x1]
      %2239 = vset.pattern.permute.xlu0 0
      %2240 = vperm.xlu0 %2239, %v2200
      %v2241 = vpop.permute.xlu0 %2240
      %2244 = vset.pattern.permute.xlu0 0
      %2245 = vperm.xlu0 %2244, %v2201
      %v2246 = vpop.permute.xlu0 %2245
      %2249 = vset.pattern.permute.xlu0 0
      %2250 = vperm.xlu0 %2249, %v2202
      %v2251 = vpop.permute.xlu0 %2250
      %2254 = vset.pattern.permute.xlu0 0
      %2255 = vperm.xlu0 %2254, %v2203
      %v2256 = vpop.permute.xlu0 %2255
      %2259 = vset.pattern.permute.xlu0 0
      %2260 = vperm.xlu0 %2259, %v2204
      %v2261 = vpop.permute.xlu0 %2260
      %2264 = vset.pattern.permute.xlu0 0
      %2265 = vperm.xlu0 %2264, %v2205
      %v2266 = vpop.permute.xlu0 %2265
      %2269 = vset.pattern.permute.xlu0 0
      %2270 = vperm.xlu0 %2269, %v2206
      %v2271 = vpop.permute.xlu0 %2270
      %2274 = vset.pattern.permute.xlu0 0
      %2275 = vperm.xlu0 %2274, %v2207
      %v2276 = vpop.permute.xlu0 %2275
      %2279 = vset.pattern.permute.xlu0 0
      %2280 = vperm.xlu0 %2279, %v2208
      %v2281 = vpop.permute.xlu0 %2280
      %2284 = vset.pattern.permute.xlu0 0
      %2285 = vperm.xlu0 %2284, %v2209
      %v2286 = vpop.permute.xlu0 %2285
      %2289 = vset.pattern.permute.xlu0 0
      %2290 = vperm.xlu0 %2289, %v2210
      %v2291 = vpop.permute.xlu0 %2290
      %2294 = vset.pattern.permute.xlu0 0
      %2295 = vperm.xlu0 %2294, %v2211
      %v2296 = vpop.permute.xlu0 %2295
      %2299 = vset.pattern.permute.xlu0 0
      %2300 = vperm.xlu0 %2299, %v2212
      %v2301 = vpop.permute.xlu0 %2300
      %2304 = vset.pattern.permute.xlu0 0
      %2305 = vperm.xlu0 %2304, %v2213
      %v2306 = vpop.permute.xlu0 %2305
      %2309 = vset.pattern.permute.xlu0 0
      %2310 = vperm.xlu0 %2309, %v2214
      %v2311 = vpop.permute.xlu0 %2310
      %2314 = vset.pattern.permute.xlu0 0
      %2315 = vperm.xlu0 %2314, %v2215
      %v2316 = vpop.permute.xlu0 %2315
      %2319 = vset.pattern.permute.xlu0 0
      %2320 = vperm.xlu0 %2319, %v2216
      %v2321 = vpop.permute.xlu0 %2320
      %2324 = vset.pattern.permute.xlu0 0
      %2325 = vperm.xlu0 %2324, %v2217
      %v2326 = vpop.permute.xlu0 %2325
      %2329 = vset.pattern.permute.xlu0 0
      %2330 = vperm.xlu0 %2329, %v2218
      %v2331 = vpop.permute.xlu0 %2330
      %2334 = vset.pattern.permute.xlu0 0
      %2335 = vperm.xlu0 %2334, %v2219
      %v2336 = vpop.permute.xlu0 %2335
      %2339 = vset.pattern.permute.xlu0 0
      %2340 = vperm.xlu0 %2339, %v2220
      %v2341 = vpop.permute.xlu0 %2340
      %2344 = vset.pattern.permute.xlu0 0
      %2345 = vperm.xlu0 %2344, %v2221
      %v2346 = vpop.permute.xlu0 %2345
      %2349 = vset.pattern.permute.xlu0 0
      %2350 = vperm.xlu0 %2349, %v2222
      %v2351 = vpop.permute.xlu0 %2350
      %2354 = vset.pattern.permute.xlu0 0
      %2355 = vperm.xlu0 %2354, %v2223
      %v2356 = vpop.permute.xlu0 %2355
      %2359 = vset.pattern.permute.xlu0 0
      %2360 = vperm.xlu0 %2359, %v2224
      %v2361 = vpop.permute.xlu0 %2360
      %2364 = vset.pattern.permute.xlu0 0
      %2365 = vperm.xlu0 %2364, %v2225
      %v2366 = vpop.permute.xlu0 %2365
      %2369 = vset.pattern.permute.xlu0 0
      %2370 = vperm.xlu0 %2369, %v2226
      %v2371 = vpop.permute.xlu0 %2370
      %2374 = vset.pattern.permute.xlu0 0
      %2375 = vperm.xlu0 %2374, %v2227
      %v2376 = vpop.permute.xlu0 %2375
      %2379 = vset.pattern.permute.xlu0 0
      %2380 = vperm.xlu0 %2379, %v2228
      %v2381 = vpop.permute.xlu0 %2380
      %2384 = vset.pattern.permute.xlu0 0
      %2385 = vperm.xlu0 %2384, %v2229
      %v2386 = vpop.permute.xlu0 %2385
      %2389 = vset.pattern.permute.xlu0 0
      %2390 = vperm.xlu0 %2389, %v2230
      %v2391 = vpop.permute.xlu0 %2390
      %2394 = vset.pattern.permute.xlu0 0
      %2395 = vperm.xlu0 %2394, %v2231
      %v2396 = vpop.permute.xlu0 %2395
      %2399 = vset.pattern.permute.xlu0 0
      %2400 = vperm.xlu0 %2399, %v2232
      %v2401 = vpop.permute.xlu0 %2400
      %2404 = vset.pattern.permute.xlu0 0
      %2405 = vperm.xlu0 %2404, %v2233
      %v2406 = vpop.permute.xlu0 %2405
      %2409 = vset.pattern.permute.xlu0 0
      %2410 = vperm.xlu0 %2409, %v2234
      %v2411 = vpop.permute.xlu0 %2410
      %2414 = vset.pattern.permute.xlu0 0
      %2415 = vperm.xlu0 %2414, %v2235
      %v2416 = vpop.permute.xlu0 %2415
      %2419 = vset.pattern.permute.xlu0 0
      %2420 = vperm.xlu0 %2419, %v2236
      %v2421 = vpop.permute.xlu0 %2420
      %v2423 = vlaneseq
      %v2424 = vshrl.u32 %v2423, 7
      %v2425 = vsub.s32 0, %v2424
      %v2426 = vrot.slane %v2237, %v2425
      %v2427 = vmul.f32 %v2241, %v2426
      %v2428 = vmul.f32 %v2246, %v2426
      %v2429 = vmul.f32 %v2251, %v2426
      %v2430 = vmul.f32 %v2256, %v2426
      %v2431 = vmul.f32 %v2261, %v2426
      %v2432 = vmul.f32 %v2266, %v2426
      %v2433 = vmul.f32 %v2271, %v2426
      %v2434 = vmul.f32 %v2276, %v2426
      %v2435 = vmul.f32 %v2281, %v2426
      %v2436 = vmul.f32 %v2286, %v2426
      %v2437 = vmul.f32 %v2291, %v2426
      %v2438 = vmul.f32 %v2296, %v2426
      %v2439 = vmul.f32 %v2301, %v2426
      %v2440 = vmul.f32 %v2306, %v2426
      %v2441 = vmul.f32 %v2311, %v2426
      %v2442 = vmul.f32 %v2316, %v2426
      %v2443 = vmul.f32 %v2321, %v2426
      %v2444 = vmul.f32 %v2326, %v2426
      %v2445 = vmul.f32 %v2331, %v2426
      %v2446 = vmul.f32 %v2336, %v2426
      %v2447 = vmul.f32 %v2341, %v2426
      %v2448 = vmul.f32 %v2346, %v2426
      %v2449 = vmul.f32 %v2351, %v2426
      %v2450 = vmul.f32 %v2356, %v2426
      %v2451 = vmul.f32 %v2361, %v2426
      %v2452 = vmul.f32 %v2366, %v2426
      %v2453 = vmul.f32 %v2371, %v2426
      %v2454 = vmul.f32 %v2376, %v2426
      %v2455 = vmul.f32 %v2381, %v2426
      %v2456 = vmul.f32 %v2386, %v2426
      %v2457 = vmul.f32 %v2391, %v2426
      %v2458 = vmul.f32 %v2396, %v2426
      %v2459 = vmul.f32 %v2401, %v2426
      %v2460 = vmul.f32 %v2406, %v2426
      %v2461 = vmul.f32 %v2411, %v2426
      %v2462 = vmul.f32 %v2416, %v2426
      %v2463 = vmul.f32 %v2421, %v2426
      %v2501 = vrot.slane %v2427, 4
      %v2502 = vrot.slane %v2428, 4
      %v2503 = vsel %vm2017, %v2501, %v2502
      %v2504 = vrot.slane %v2429, 4
      %v2505 = vsel %vm2017, %v2502, %v2504
      %v2506 = vrot.slane %v2430, 4
      %v2507 = vsel %vm2017, %v2504, %v2506
      %v2508 = vrot.slane %v2431, 4
      %v2509 = vsel %vm2017, %v2506, %v2508
      %v2510 = vrot.slane %v2432, 4
      %v2511 = vsel %vm2017, %v2508, %v2510
      %v2512 = vrot.slane %v2433, 4
      %v2513 = vsel %vm2017, %v2510, %v2512
      %v2514 = vrot.slane %v2434, 4
      %v2515 = vsel %vm2017, %v2512, %v2514
      %v2516 = vrot.slane %v2435, 4
      %v2517 = vsel %vm2017, %v2514, %v2516
      %v2518 = vrot.slane %v2436, 4
      %v2519 = vsel %vm2017, %v2516, %v2518
      %v2520 = vrot.slane %v2437, 4
      %v2521 = vsel %vm2017, %v2518, %v2520
      %v2522 = vrot.slane %v2438, 4
      %v2523 = vsel %vm2017, %v2520, %v2522
      %v2524 = vrot.slane %v2439, 4
      %v2525 = vsel %vm2017, %v2522, %v2524
      %v2526 = vrot.slane %v2440, 4
      %v2527 = vsel %vm2017, %v2524, %v2526
      %v2528 = vrot.slane %v2441, 4
      %v2529 = vsel %vm2017, %v2526, %v2528
      %v2530 = vrot.slane %v2442, 4
      %v2531 = vsel %vm2017, %v2528, %v2530
      %v2532 = vrot.slane %v2443, 4
      %v2533 = vsel %vm2017, %v2530, %v2532
      %v2534 = vrot.slane %v2444, 4
      %v2535 = vsel %vm2017, %v2532, %v2534
      %v2536 = vrot.slane %v2445, 4
      %v2537 = vsel %vm2017, %v2534, %v2536
      %v2538 = vrot.slane %v2446, 4
      %v2539 = vsel %vm2017, %v2536, %v2538
      %v2540 = vrot.slane %v2447, 4
      %v2541 = vsel %vm2017, %v2538, %v2540
      %v2542 = vrot.slane %v2448, 4
      %v2543 = vsel %vm2017, %v2540, %v2542
      %v2544 = vrot.slane %v2449, 4
      %v2545 = vsel %vm2017, %v2542, %v2544
      %v2546 = vrot.slane %v2450, 4
      %v2547 = vsel %vm2017, %v2544, %v2546
      %v2548 = vrot.slane %v2451, 4
      %v2549 = vsel %vm2017, %v2546, %v2548
      %v2550 = vrot.slane %v2452, 4
      %v2551 = vsel %vm2017, %v2548, %v2550
      %v2552 = vrot.slane %v2453, 4
      %v2553 = vsel %vm2017, %v2550, %v2552
      %v2554 = vrot.slane %v2454, 4
      %v2555 = vsel %vm2017, %v2552, %v2554
      %v2556 = vrot.slane %v2455, 4
      %v2557 = vsel %vm2017, %v2554, %v2556
      %v2558 = vrot.slane %v2456, 4
      %v2559 = vsel %vm2017, %v2556, %v2558
      %v2560 = vrot.slane %v2457, 4
      %v2561 = vsel %vm2017, %v2558, %v2560
      %v2562 = vrot.slane %v2458, 4
      %v2563 = vsel %vm2017, %v2560, %v2562
      %v2564 = vrot.slane %v2459, 4
      %v2565 = vsel %vm2017, %v2562, %v2564
      %v2566 = vrot.slane %v2460, 4
      %v2567 = vsel %vm2017, %v2564, %v2566
      %v2568 = vrot.slane %v2461, 4
      %v2569 = vsel %vm2017, %v2566, %v2568
      %v2570 = vrot.slane %v2462, 4
      %v2571 = vsel %vm2017, %v2568, %v2570
      %v2572 = vrot.slane %v2463, 4
      %v2573 = vsel %vm2017, %v2570, %v2572
      %v2610 = vadd.f32 %v2127, %v2503
      %v2611 = vadd.f32 %v2128, %v2505
      %v2612 = vadd.f32 %v2129, %v2507
      %v2613 = vadd.f32 %v2130, %v2509
      %v2614 = vadd.f32 %v2131, %v2511
      %v2615 = vadd.f32 %v2132, %v2513
      %v2616 = vadd.f32 %v2133, %v2515
      %v2617 = vadd.f32 %v2134, %v2517
      %v2618 = vadd.f32 %v2135, %v2519
      %v2619 = vadd.f32 %v2136, %v2521
      %v2620 = vadd.f32 %v2137, %v2523
      %v2621 = vadd.f32 %v2138, %v2525
      %v2622 = vadd.f32 %v2139, %v2527
      %v2623 = vadd.f32 %v2140, %v2529
      %v2624 = vadd.f32 %v2141, %v2531
      %v2625 = vadd.f32 %v2142, %v2533
      %v2626 = vadd.f32 %v2143, %v2535
      %v2627 = vadd.f32 %v2144, %v2537
      %v2628 = vadd.f32 %v2145, %v2539
      %v2629 = vadd.f32 %v2146, %v2541
      %v2630 = vadd.f32 %v2147, %v2543
      %v2631 = vadd.f32 %v2148, %v2545
      %v2632 = vadd.f32 %v2149, %v2547
      %v2633 = vadd.f32 %v2150, %v2549
      %v2634 = vadd.f32 %v2151, %v2551
      %v2635 = vadd.f32 %v2152, %v2553
      %v2636 = vadd.f32 %v2153, %v2555
      %v2637 = vadd.f32 %v2154, %v2557
      %v2638 = vadd.f32 %v2155, %v2559
      %v2639 = vadd.f32 %v2156, %v2561
      %v2640 = vadd.f32 %v2157, %v2563
      %v2641 = vadd.f32 %v2158, %v2565
      %v2642 = vadd.f32 %v2159, %v2567
      %v2643 = vadd.f32 %v2160, %v2569
      %v2644 = vadd.f32 %v2161, %v2571
      %v2645 = vadd.f32 %v2162, %v2573
      %v2646 = vld [vmem:[%s165 + $0xa0] sm:$0x7]
      %v2647 = vunpack.c.l.bf16 %v2646
      %v2648 = vld [vmem:[%s1 + $0x7] sm:$0x1]
      %2650 = vset.pattern.permute.xlu0 0
      %2651 = vperm.xlu0 %2650, %v2647
      %v2652 = vpop.permute.xlu0 %2651
      %v2654 = vlaneseq
      %v2655 = vshrl.u32 %v2654, 7
      %v2656 = vsub.s32 0, %v2655
      %v2657 = vrot.slane %v2648, %v2656
      %v2658 = vmul.f32 %v2241, %v2657
      %v2659 = vmul.f32 %v2246, %v2657
      %v2660 = vmul.f32 %v2251, %v2657
      %v2661 = vmul.f32 %v2256, %v2657
      %v2662 = vmul.f32 %v2261, %v2657
      %v2663 = vmul.f32 %v2266, %v2657
      %v2664 = vmul.f32 %v2271, %v2657
      %v2665 = vmul.f32 %v2276, %v2657
      %v2666 = vmul.f32 %v2281, %v2657
      %v2667 = vmul.f32 %v2286, %v2657
      %v2668 = vmul.f32 %v2291, %v2657
      %v2669 = vmul.f32 %v2296, %v2657
      %v2670 = vmul.f32 %v2301, %v2657
      %v2671 = vmul.f32 %v2306, %v2657
      %v2672 = vmul.f32 %v2311, %v2657
      %v2673 = vmul.f32 %v2316, %v2657
      %v2674 = vmul.f32 %v2321, %v2657
      %v2675 = vmul.f32 %v2326, %v2657
      %v2676 = vmul.f32 %v2331, %v2657
      %v2677 = vmul.f32 %v2336, %v2657
      %v2678 = vmul.f32 %v2341, %v2657
      %v2679 = vmul.f32 %v2346, %v2657
      %v2680 = vmul.f32 %v2351, %v2657
      %v2681 = vmul.f32 %v2356, %v2657
      %v2682 = vmul.f32 %v2361, %v2657
      %v2683 = vmul.f32 %v2366, %v2657
      %v2684 = vmul.f32 %v2371, %v2657
      %v2685 = vmul.f32 %v2376, %v2657
      %v2686 = vmul.f32 %v2381, %v2657
      %v2687 = vmul.f32 %v2386, %v2657
      %v2688 = vmul.f32 %v2391, %v2657
      %v2689 = vmul.f32 %v2396, %v2657
      %v2690 = vmul.f32 %v2401, %v2657
      %v2691 = vmul.f32 %v2406, %v2657
      %v2692 = vmul.f32 %v2411, %v2657
      %v2693 = vmul.f32 %v2416, %v2657
      %v2694 = vmul.f32 %v2652, %v2657
      %vm2732 = vcmask 1042432
      %v2733 = vrot.slane %v2658, 5
      %v2734 = vrot.slane %v2659, 5
      %v2735 = vsel %vm2732, %v2733, %v2734
      %v2736 = vrot.slane %v2660, 5
      %v2737 = vsel %vm2732, %v2734, %v2736
      %v2738 = vrot.slane %v2661, 5
      %v2739 = vsel %vm2732, %v2736, %v2738
      %v2740 = vrot.slane %v2662, 5
      %v2741 = vsel %vm2732, %v2738, %v2740
      %v2742 = vrot.slane %v2663, 5
      %v2743 = vsel %vm2732, %v2740, %v2742
      %v2744 = vrot.slane %v2664, 5
      %v2745 = vsel %vm2732, %v2742, %v2744
      %v2746 = vrot.slane %v2665, 5
      %v2747 = vsel %vm2732, %v2744, %v2746
      %v2748 = vrot.slane %v2666, 5
      %v2749 = vsel %vm2732, %v2746, %v2748
      %v2750 = vrot.slane %v2667, 5
      %v2751 = vsel %vm2732, %v2748, %v2750
      %v2752 = vrot.slane %v2668, 5
      %v2753 = vsel %vm2732, %v2750, %v2752
      %v2754 = vrot.slane %v2669, 5
      %v2755 = vsel %vm2732, %v2752, %v2754
      %v2756 = vrot.slane %v2670, 5
      %v2757 = vsel %vm2732, %v2754, %v2756
      %v2758 = vrot.slane %v2671, 5
      %v2759 = vsel %vm2732, %v2756, %v2758
      %v2760 = vrot.slane %v2672, 5
      %v2761 = vsel %vm2732, %v2758, %v2760
      %v2762 = vrot.slane %v2673, 5
      %v2763 = vsel %vm2732, %v2760, %v2762
      %v2764 = vrot.slane %v2674, 5
      %v2765 = vsel %vm2732, %v2762, %v2764
      %v2766 = vrot.slane %v2675, 5
      %v2767 = vsel %vm2732, %v2764, %v2766
      %v2768 = vrot.slane %v2676, 5
      %v2769 = vsel %vm2732, %v2766, %v2768
      %v2770 = vrot.slane %v2677, 5
      %v2771 = vsel %vm2732, %v2768, %v2770
      %v2772 = vrot.slane %v2678, 5
      %v2773 = vsel %vm2732, %v2770, %v2772
      %v2774 = vrot.slane %v2679, 5
      %v2775 = vsel %vm2732, %v2772, %v2774
      %v2776 = vrot.slane %v2680, 5
      %v2777 = vsel %vm2732, %v2774, %v2776
      %v2778 = vrot.slane %v2681, 5
      %v2779 = vsel %vm2732, %v2776, %v2778
      %v2780 = vrot.slane %v2682, 5
      %v2781 = vsel %vm2732, %v2778, %v2780
      %v2782 = vrot.slane %v2683, 5
      %v2783 = vsel %vm2732, %v2780, %v2782
      %v2784 = vrot.slane %v2684, 5
      %v2785 = vsel %vm2732, %v2782, %v2784
      %v2786 = vrot.slane %v2685, 5
      %v2787 = vsel %vm2732, %v2784, %v2786
      %v2788 = vrot.slane %v2686, 5
      %v2789 = vsel %vm2732, %v2786, %v2788
      %v2790 = vrot.slane %v2687, 5
      %v2791 = vsel %vm2732, %v2788, %v2790
      %v2792 = vrot.slane %v2688, 5
      %v2793 = vsel %vm2732, %v2790, %v2792
      %v2794 = vrot.slane %v2689, 5
      %v2795 = vsel %vm2732, %v2792, %v2794
      %v2796 = vrot.slane %v2690, 5
      %v2797 = vsel %vm2732, %v2794, %v2796
      %v2798 = vrot.slane %v2691, 5
      %v2799 = vsel %vm2732, %v2796, %v2798
      %v2800 = vrot.slane %v2692, 5
      %v2801 = vsel %vm2732, %v2798, %v2800
      %v2802 = vrot.slane %v2693, 5
      %v2803 = vsel %vm2732, %v2800, %v2802
      %v2804 = vrot.slane %v2694, 5
      %v2805 = vsel %vm2732, %v2802, %v2804
      %v2842 = vadd.f32 %v2610, %v2735
      %v2843 = vadd.f32 %v2611, %v2737
      %v2844 = vadd.f32 %v2612, %v2739
      %v2845 = vadd.f32 %v2613, %v2741
      %v2846 = vadd.f32 %v2614, %v2743
      %v2847 = vadd.f32 %v2615, %v2745
      %v2848 = vadd.f32 %v2616, %v2747
      %v2849 = vadd.f32 %v2617, %v2749
      %v2850 = vadd.f32 %v2618, %v2751
      %v2851 = vadd.f32 %v2619, %v2753
      %v2852 = vadd.f32 %v2620, %v2755
      %v2853 = vadd.f32 %v2621, %v2757
      %v2854 = vadd.f32 %v2622, %v2759
      %v2855 = vadd.f32 %v2623, %v2761
      %v2856 = vadd.f32 %v2624, %v2763
      %v2857 = vadd.f32 %v2625, %v2765
      %v2858 = vadd.f32 %v2626, %v2767
      %v2859 = vadd.f32 %v2627, %v2769
      %v2860 = vadd.f32 %v2628, %v2771
      %v2861 = vadd.f32 %v2629, %v2773
      %v2862 = vadd.f32 %v2630, %v2775
      %v2863 = vadd.f32 %v2631, %v2777
      %v2864 = vadd.f32 %v2632, %v2779
      %v2865 = vadd.f32 %v2633, %v2781
      %v2866 = vadd.f32 %v2634, %v2783
      %v2867 = vadd.f32 %v2635, %v2785
      %v2868 = vadd.f32 %v2636, %v2787
      %v2869 = vadd.f32 %v2637, %v2789
      %v2870 = vadd.f32 %v2638, %v2791
      %v2871 = vadd.f32 %v2639, %v2793
      %v2872 = vadd.f32 %v2640, %v2795
      %v2873 = vadd.f32 %v2641, %v2797
      %v2874 = vadd.f32 %v2642, %v2799
      %v2875 = vadd.f32 %v2643, %v2801
      %v2876 = vadd.f32 %v2644, %v2803
      %v2877 = vadd.f32 %v2645, %v2805
      %v2878 = vld [vmem:[%s165 + $0x10] sm:$0x8]
      %v2879 = vunpack.c.l.bf16 %v2878
      %v2880 = vld [vmem:[%s1 + $0x8] sm:$0x1]
      %2882 = vset.pattern.permute.xlu0 0
      %2883 = vperm.xlu0 %2882, %v2879
      %v2884 = vpop.permute.xlu0 %2883
      %v2886 = vlaneseq
      %v2887 = vshrl.u32 %v2886, 7
      %v2888 = vsub.s32 0, %v2887
      %v2889 = vrot.slane %v2880, %v2888
      %v2890 = vmul.f32 %v2884, %v2889
      %v2891 = vmul.f32 %v2246, %v2889
      %v2892 = vmul.f32 %v2251, %v2889
      %v2893 = vmul.f32 %v2256, %v2889
      %v2894 = vmul.f32 %v2261, %v2889
      %v2895 = vmul.f32 %v2266, %v2889
      %v2896 = vmul.f32 %v2271, %v2889
      %v2897 = vmul.f32 %v2276, %v2889
      %v2898 = vmul.f32 %v2281, %v2889
      %v2899 = vmul.f32 %v2286, %v2889
      %v2900 = vmul.f32 %v2291, %v2889
      %v2901 = vmul.f32 %v2296, %v2889
      %v2902 = vmul.f32 %v2301, %v2889
      %v2903 = vmul.f32 %v2306, %v2889
      %v2904 = vmul.f32 %v2311, %v2889
      %v2905 = vmul.f32 %v2316, %v2889
      %v2906 = vmul.f32 %v2321, %v2889
      %v2907 = vmul.f32 %v2326, %v2889
      %v2908 = vmul.f32 %v2331, %v2889
      %v2909 = vmul.f32 %v2336, %v2889
      %v2910 = vmul.f32 %v2341, %v2889
      %v2911 = vmul.f32 %v2346, %v2889
      %v2912 = vmul.f32 %v2351, %v2889
      %v2913 = vmul.f32 %v2356, %v2889
      %v2914 = vmul.f32 %v2361, %v2889
      %v2915 = vmul.f32 %v2366, %v2889
      %v2916 = vmul.f32 %v2371, %v2889
      %v2917 = vmul.f32 %v2376, %v2889
      %v2918 = vmul.f32 %v2381, %v2889
      %v2919 = vmul.f32 %v2386, %v2889
      %v2920 = vmul.f32 %v2391, %v2889
      %v2921 = vmul.f32 %v2396, %v2889
      %v2922 = vmul.f32 %v2401, %v2889
      %v2923 = vmul.f32 %v2406, %v2889
      %v2924 = vmul.f32 %v2411, %v2889
      %v2925 = vmul.f32 %v2416, %v2889
      %v2926 = vmul.f32 %v2652, %v2889
      %vm2964 = vcmask 1041408
      %v2965 = vrot.slane %v2890, 6
      %v2966 = vrot.slane %v2891, 6
      %v2967 = vsel %vm2964, %v2965, %v2966
      %v2968 = vrot.slane %v2892, 6
      %v2969 = vsel %vm2964, %v2966, %v2968
      %v2970 = vrot.slane %v2893, 6
      %v2971 = vsel %vm2964, %v2968, %v2970
      %v2972 = vrot.slane %v2894, 6
      %v2973 = vsel %vm2964, %v2970, %v2972
      %v2974 = vrot.slane %v2895, 6
      %v2975 = vsel %vm2964, %v2972, %v2974
      %v2976 = vrot.slane %v2896, 6
      %v2977 = vsel %vm2964, %v2974, %v2976
      %v2978 = vrot.slane %v2897, 6
      %v2979 = vsel %vm2964, %v2976, %v2978
      %v2980 = vrot.slane %v2898, 6
      %v2981 = vsel %vm2964, %v2978, %v2980
      %v2982 = vrot.slane %v2899, 6
      %v2983 = vsel %vm2964, %v2980, %v2982
      %v2984 = vrot.slane %v2900, 6
      %v2985 = vsel %vm2964, %v2982, %v2984
      %v2986 = vrot.slane %v2901, 6
      %v2987 = vsel %vm2964, %v2984, %v2986
      %v2988 = vrot.slane %v2902, 6
      %v2989 = vsel %vm2964, %v2986, %v2988
      %v2990 = vrot.slane %v2903, 6
      %v2991 = vsel %vm2964, %v2988, %v2990
      %v2992 = vrot.slane %v2904, 6
      %v2993 = vsel %vm2964, %v2990, %v2992
      %v2994 = vrot.slane %v2905, 6
      %v2995 = vsel %vm2964, %v2992, %v2994
      %v2996 = vrot.slane %v2906, 6
      %v2997 = vsel %vm2964, %v2994, %v2996
      %v2998 = vrot.slane %v2907, 6
      %v2999 = vsel %vm2964, %v2996, %v2998
      %v3000 = vrot.slane %v2908, 6
      %v3001 = vsel %vm2964, %v2998, %v3000
      %v3002 = vrot.slane %v2909, 6
      %v3003 = vsel %vm2964, %v3000, %v3002
      %v3004 = vrot.slane %v2910, 6
      %v3005 = vsel %vm2964, %v3002, %v3004
      %v3006 = vrot.slane %v2911, 6
      %v3007 = vsel %vm2964, %v3004, %v3006
      %v3008 = vrot.slane %v2912, 6
      %v3009 = vsel %vm2964, %v3006, %v3008
      %v3010 = vrot.slane %v2913, 6
      %v3011 = vsel %vm2964, %v3008, %v3010
      %v3012 = vrot.slane %v2914, 6
      %v3013 = vsel %vm2964, %v3010, %v3012
      %v3014 = vrot.slane %v2915, 6
      %v3015 = vsel %vm2964, %v3012, %v3014
      %v3016 = vrot.slane %v2916, 6
      %v3017 = vsel %vm2964, %v3014, %v3016
      %v3018 = vrot.slane %v2917, 6
      %v3019 = vsel %vm2964, %v3016, %v3018
      %v3020 = vrot.slane %v2918, 6
      %v3021 = vsel %vm2964, %v3018, %v3020
      %v3022 = vrot.slane %v2919, 6
      %v3023 = vsel %vm2964, %v3020, %v3022
      %v3024 = vrot.slane %v2920, 6
      %v3025 = vsel %vm2964, %v3022, %v3024
      %v3026 = vrot.slane %v2921, 6
      %v3027 = vsel %vm2964, %v3024, %v3026
      %v3028 = vrot.slane %v2922, 6
      %v3029 = vsel %vm2964, %v3026, %v3028
      %v3030 = vrot.slane %v2923, 6
      %v3031 = vsel %vm2964, %v3028, %v3030
      %v3032 = vrot.slane %v2924, 6
      %v3033 = vsel %vm2964, %v3030, %v3032
      %v3034 = vrot.slane %v2925, 6
      %v3035 = vsel %vm2964, %v3032, %v3034
      %v3036 = vrot.slane %v2926, 6
      %v3037 = vsel %vm2964, %v3034, %v3036
      %v3074 = vadd.f32 %v2842, %v2967
      %v3075 = vadd.f32 %v2843, %v2969
      %v3076 = vadd.f32 %v2844, %v2971
      %v3077 = vadd.f32 %v2845, %v2973
      %v3078 = vadd.f32 %v2846, %v2975
      %v3079 = vadd.f32 %v2847, %v2977
      %v3080 = vadd.f32 %v2848, %v2979
      %v3081 = vadd.f32 %v2849, %v2981
      %v3082 = vadd.f32 %v2850, %v2983
      %v3083 = vadd.f32 %v2851, %v2985
      %v3084 = vadd.f32 %v2852, %v2987
      %v3085 = vadd.f32 %v2853, %v2989
      %v3086 = vadd.f32 %v2854, %v2991
      %v3087 = vadd.f32 %v2855, %v2993
      %v3088 = vadd.f32 %v2856, %v2995
      %v3089 = vadd.f32 %v2857, %v2997
      %v3090 = vadd.f32 %v2858, %v2999
      %v3091 = vadd.f32 %v2859, %v3001
      %v3092 = vadd.f32 %v2860, %v3003
      %v3093 = vadd.f32 %v2861, %v3005
      %v3094 = vadd.f32 %v2862, %v3007
      %v3095 = vadd.f32 %v2863, %v3009
      %v3096 = vadd.f32 %v2864, %v3011
      %v3097 = vadd.f32 %v2865, %v3013
      %v3098 = vadd.f32 %v2866, %v3015
      %v3099 = vadd.f32 %v2867, %v3017
      %v3100 = vadd.f32 %v2868, %v3019
      %v3101 = vadd.f32 %v2869, %v3021
      %v3102 = vadd.f32 %v2870, %v3023
      %v3103 = vadd.f32 %v2871, %v3025
      %v3104 = vadd.f32 %v2872, %v3027
      %v3105 = vadd.f32 %v2873, %v3029
      %v3106 = vadd.f32 %v2874, %v3031
      %v3107 = vadd.f32 %v2875, %v3033
      %v3108 = vadd.f32 %v2876, %v3035
      %v3109 = vadd.f32 %v2877, %v3037
      %v3110 = vld [vmem:[%s2] sm:$0x1]
      %v3112 = vlaneseq
      %v3113 = vshrl.u32 %v3112, 7
      %v3114 = vsub.s32 0, %v3113
      %v3115 = vrot.slane %v3110, %v3114
      %v3117 = vadd.f32 %v3074, %v3115
      %v3118 = vadd.f32 %v3075, %v3115
      %v3119 = vadd.f32 %v3076, %v3115
      %v3120 = vadd.f32 %v3077, %v3115
      %v3121 = vadd.f32 %v3078, %v3115
      %v3122 = vadd.f32 %v3079, %v3115
      %v3123 = vadd.f32 %v3080, %v3115
      %v3124 = vadd.f32 %v3081, %v3115
      %v3125 = vadd.f32 %v3082, %v3115
      %v3126 = vadd.f32 %v3083, %v3115
      %v3127 = vadd.f32 %v3084, %v3115
      %v3128 = vadd.f32 %v3085, %v3115
      %v3129 = vadd.f32 %v3086, %v3115
      %v3130 = vadd.f32 %v3087, %v3115
      %v3131 = vadd.f32 %v3088, %v3115
      %v3132 = vadd.f32 %v3089, %v3115
      %v3133 = vadd.f32 %v3090, %v3115
      %v3134 = vadd.f32 %v3091, %v3115
      %v3135 = vadd.f32 %v3092, %v3115
      %v3136 = vadd.f32 %v3093, %v3115
      %v3137 = vadd.f32 %v3094, %v3115
      %v3138 = vadd.f32 %v3095, %v3115
      %v3139 = vadd.f32 %v3096, %v3115
      %v3140 = vadd.f32 %v3097, %v3115
      %v3141 = vadd.f32 %v3098, %v3115
      %v3142 = vadd.f32 %v3099, %v3115
      %v3143 = vadd.f32 %v3100, %v3115
      %v3144 = vadd.f32 %v3101, %v3115
      %v3145 = vadd.f32 %v3102, %v3115
      %v3146 = vadd.f32 %v3103, %v3115
      %v3147 = vadd.f32 %v3104, %v3115
      %v3148 = vadd.f32 %v3105, %v3115
      %v3149 = vadd.f32 %v3106, %v3115
      %v3150 = vadd.f32 %v3107, %v3115
      %v3151 = vadd.f32 %v3108, %v3115
      %v3152 = vadd.f32 %v3109, %v3115
      %v3153 = vmax.f32 %v3117, 0.0
      %v3154 = vmax.f32 %v3118, 0.0
      %v3155 = vmax.f32 %v3119, 0.0
      %v3156 = vmax.f32 %v3120, 0.0
      %v3157 = vmax.f32 %v3121, 0.0
      %v3158 = vmax.f32 %v3122, 0.0
      %v3159 = vmax.f32 %v3123, 0.0
      %v3160 = vmax.f32 %v3124, 0.0
      %v3161 = vmax.f32 %v3125, 0.0
      %v3162 = vmax.f32 %v3126, 0.0
      %v3163 = vmax.f32 %v3127, 0.0
      %v3164 = vmax.f32 %v3128, 0.0
      %v3165 = vmax.f32 %v3129, 0.0
      %v3166 = vmax.f32 %v3130, 0.0
      %v3167 = vmax.f32 %v3131, 0.0
      %v3168 = vmax.f32 %v3132, 0.0
      %v3169 = vmax.f32 %v3133, 0.0
      %v3170 = vmax.f32 %v3134, 0.0
      %v3171 = vmax.f32 %v3135, 0.0
      %v3172 = vmax.f32 %v3136, 0.0
      %v3173 = vmax.f32 %v3137, 0.0
      %v3174 = vmax.f32 %v3138, 0.0
      %v3175 = vmax.f32 %v3139, 0.0
      %v3176 = vmax.f32 %v3140, 0.0
      %v3177 = vmax.f32 %v3141, 0.0
      %v3178 = vmax.f32 %v3142, 0.0
      %v3179 = vmax.f32 %v3143, 0.0
      %v3180 = vmax.f32 %v3144, 0.0
      %v3181 = vmax.f32 %v3145, 0.0
      %v3182 = vmax.f32 %v3146, 0.0
      %v3183 = vmax.f32 %v3147, 0.0
      %v3184 = vmax.f32 %v3148, 0.0
      %v3185 = vmax.f32 %v3149, 0.0
      %v3186 = vmax.f32 %v3150, 0.0
      %v3187 = vmax.f32 %v3151, 0.0
      %v3188 = vmax.f32 %v3152, 0.0
      %v3189 = vpack.c.bf16 %v3154, %v3153
      %v3190 = vpack.c.bf16 %v3156, %v3155
      %v3191 = vpack.c.bf16 %v3158, %v3157
      %v3192 = vpack.c.bf16 %v3160, %v3159
      %v3193 = vpack.c.bf16 %v3162, %v3161
      %v3194 = vpack.c.bf16 %v3164, %v3163
      %v3195 = vpack.c.bf16 %v3166, %v3165
      %v3196 = vpack.c.bf16 %v3168, %v3167
      %v3197 = vpack.c.bf16 %v3170, %v3169
      %v3198 = vpack.c.bf16 %v3172, %v3171
      %v3199 = vpack.c.bf16 %v3174, %v3173
      %v3200 = vpack.c.bf16 %v3176, %v3175
      %v3201 = vpack.c.bf16 %v3178, %v3177
      %v3202 = vpack.c.bf16 %v3180, %v3179
      %v3203 = vpack.c.bf16 %v3182, %v3181
      %v3204 = vpack.c.bf16 %v3184, %v3183
      %v3205 = vpack.c.bf16 %v3186, %v3185
      %v3206 = vpack.c.bf16 %v3188, %v3187
      %v3225 = vunpack.c.l.b16 %v3189
      %v3226 = vunpack.c.h.b16 %v3189
      %v3227 = vunpack.c.l.b16 %v3190
      %v3228 = vunpack.c.h.b16 %v3190
      %v3229 = vunpack.c.l.b16 %v3191
      %v3230 = vunpack.c.h.b16 %v3191
      %v3231 = vunpack.c.l.b16 %v3192
      %v3232 = vunpack.c.h.b16 %v3192
      %v3233 = vunpack.c.l.b16 %v3193
      %v3234 = vunpack.c.h.b16 %v3193
      %v3235 = vunpack.c.l.b16 %v3194
      %v3236 = vunpack.c.h.b16 %v3194
      %v3237 = vunpack.c.l.b16 %v3195
      %v3238 = vunpack.c.h.b16 %v3195
      %v3239 = vunpack.c.l.b16 %v3196
      %v3240 = vunpack.c.h.b16 %v3196
      %v3241 = vunpack.c.l.b16 %v3197
      %v3242 = vunpack.c.h.b16 %v3197
      %v3243 = vunpack.c.l.b16 %v3198
      %v3244 = vunpack.c.h.b16 %v3198
      %v3245 = vunpack.c.l.b16 %v3199
      %v3246 = vunpack.c.h.b16 %v3199
      %v3247 = vunpack.c.l.b16 %v3200
      %v3248 = vunpack.c.h.b16 %v3200
      %v3249 = vunpack.c.l.b16 %v3201
      %v3250 = vunpack.c.h.b16 %v3201
      %v3251 = vunpack.c.l.b16 %v3202
      %v3252 = vunpack.c.h.b16 %v3202
      %v3253 = vunpack.c.l.b16 %v3203
      %v3254 = vunpack.c.h.b16 %v3203
      %v3255 = vunpack.c.l.b16 %v3204
      %v3256 = vunpack.c.h.b16 %v3204
      %v3257 = vunpack.c.l.b16 %v3205
      %v3258 = vunpack.c.h.b16 %v3205
      %v3259 = vunpack.c.l.b16 %v3206
      %v3260 = vunpack.c.h.b16 %v3206
      %v3261 = vpack.c.b16 %v3225, %v3225
      %v3262 = vpack.c.b16 %v3226, %v3226
      %v3263 = vpack.c.b16 %v3227, %v3227
      %v3264 = vpack.c.b16 %v3228, %v3228
      %v3265 = vpack.c.b16 %v3229, %v3229
      %v3266 = vpack.c.b16 %v3230, %v3230
      %v3267 = vpack.c.b16 %v3231, %v3231
      %v3268 = vpack.c.b16 %v3232, %v3232
      %v3269 = vpack.c.b16 %v3233, %v3233
      %v3270 = vpack.c.b16 %v3234, %v3234
      %v3271 = vpack.c.b16 %v3235, %v3235
      %v3272 = vpack.c.b16 %v3236, %v3236
      %v3273 = vpack.c.b16 %v3237, %v3237
      %v3274 = vpack.c.b16 %v3238, %v3238
      %v3275 = vpack.c.b16 %v3239, %v3239
      %v3276 = vpack.c.b16 %v3240, %v3240
      %v3277 = vpack.c.b16 %v3241, %v3241
      %v3278 = vpack.c.b16 %v3242, %v3242
      %v3279 = vpack.c.b16 %v3243, %v3243
      %v3280 = vpack.c.b16 %v3244, %v3244
      %v3281 = vpack.c.b16 %v3245, %v3245
      %v3282 = vpack.c.b16 %v3246, %v3246
      %v3283 = vpack.c.b16 %v3247, %v3247
      %v3284 = vpack.c.b16 %v3248, %v3248
      %v3285 = vpack.c.b16 %v3249, %v3249
      %v3286 = vpack.c.b16 %v3250, %v3250
      %v3287 = vpack.c.b16 %v3251, %v3251
      %v3288 = vpack.c.b16 %v3252, %v3252
      %v3289 = vpack.c.b16 %v3253, %v3253
      %v3290 = vpack.c.b16 %v3254, %v3254
      %v3291 = vpack.c.b16 %v3255, %v3255
      %v3292 = vpack.c.b16 %v3256, %v3256
      %v3293 = vpack.c.b16 %v3257, %v3257
      %v3294 = vpack.c.b16 %v3258, %v3258
      %v3295 = vpack.c.b16 %v3259, %v3259
      %v3296 = vpack.c.b16 %v3260, %v3260
      %vm3333 = vcmask 519168
      %3334 = vst.msk [vmem:[%s170] sm:$0xf] %vm3333, %v3261
      %3335 = vst.msk [vmem:[%s170 + $0x4] sm:$0xf] %vm3333, %v3262
      %3336 = vst.msk [vmem:[%s170 + $0x8] sm:$0xf] %vm3333, %v3263
      %3337 = vst.msk [vmem:[%s170 + $0xc] sm:$0xf] %vm3333, %v3264
      %3338 = vst.msk [vmem:[%s170 + $0x10] sm:$0xf] %vm3333, %v3265
      %3339 = vst.msk [vmem:[%s170 + $0x14] sm:$0xf] %vm3333, %v3266
      %3340 = vst.msk [vmem:[%s170 + $0x18] sm:$0xf] %vm3333, %v3267
      %3341 = vst.msk [vmem:[%s170 + $0x1c] sm:$0xf] %vm3333, %v3268
      %3342 = vst.msk [vmem:[%s170 + $0x20] sm:$0xf] %vm3333, %v3269
      %3343 = vst.msk [vmem:[%s170 + $0x24] sm:$0xf] %vm3333, %v3270
      %3344 = vst.msk [vmem:[%s170 + $0x28] sm:$0xf] %vm3333, %v3271
      %3345 = vst.msk [vmem:[%s170 + $0x2c] sm:$0xf] %vm3333, %v3272
      %3346 = vst.msk [vmem:[%s170 + $0x30] sm:$0xf] %vm3333, %v3273
      %3347 = vst.msk [vmem:[%s170 + $0x34] sm:$0xf] %vm3333, %v3274
      %3348 = vst.msk [vmem:[%s170 + $0x38] sm:$0xf] %vm3333, %v3275
      %3349 = vst.msk [vmem:[%s170 + $0x3c] sm:$0xf] %vm3333, %v3276
      %3350 = vst.msk [vmem:[%s170 + $0x40] sm:$0xf] %vm3333, %v3277
      %3351 = vst.msk [vmem:[%s170 + $0x44] sm:$0xf] %vm3333, %v3278
      %3352 = vst.msk [vmem:[%s170 + $0x48] sm:$0xf] %vm3333, %v3279
      %3353 = vst.msk [vmem:[%s170 + $0x4c] sm:$0xf] %vm3333, %v3280
      %3354 = vst.msk [vmem:[%s170 + $0x50] sm:$0xf] %vm3333, %v3281
      %3355 = vst.msk [vmem:[%s170 + $0x54] sm:$0xf] %vm3333, %v3282
      %3356 = vst.msk [vmem:[%s170 + $0x58] sm:$0xf] %vm3333, %v3283
      %3357 = vst.msk [vmem:[%s170 + $0x5c] sm:$0xf] %vm3333, %v3284
      %3358 = vst.msk [vmem:[%s170 + $0x60] sm:$0xf] %vm3333, %v3285
      %3359 = vst.msk [vmem:[%s170 + $0x64] sm:$0xf] %vm3333, %v3286
      %3360 = vst.msk [vmem:[%s170 + $0x68] sm:$0xf] %vm3333, %v3287
      %3361 = vst.msk [vmem:[%s170 + $0x6c] sm:$0xf] %vm3333, %v3288
      %3362 = vst.msk [vmem:[%s170 + $0x70] sm:$0xf] %vm3333, %v3289
      %3363 = vst.msk [vmem:[%s170 + $0x74] sm:$0xf] %vm3333, %v3290
      %3364 = vst.msk [vmem:[%s170 + $0x78] sm:$0xf] %vm3333, %v3291
      %3365 = vst.msk [vmem:[%s170 + $0x7c] sm:$0xf] %vm3333, %v3292
      %3366 = vst.msk [vmem:[%s170 + $0x80] sm:$0xf] %vm3333, %v3293
      %3367 = vst.msk [vmem:[%s170 + $0x84] sm:$0xf] %vm3333, %v3294
      %3368 = vst.msk [vmem:[%s170 + $0x88] sm:$0xf] %vm3333, %v3295
      %3369 = vst.msk [vmem:[%s170 + $0x8c] sm:$0xf] %vm3333, %v3296
      %p3370 = scmp.lt.s32.totalorder %s14, 1
      %s3371 = scalar_select %p3370, %s14, 1
      %s3372 = smul.addr %s3371, 36
      %s3373 = smul.addr %s3372, 4
      %s3374 = scalar_lea.vmem %s3, %s3373
      // Predicated region
      $region33: #{tpu_custom_call.1} parent=31 // pred_check
        %p3375 = pneg %p100
      $region34: #{tpu_custom_call.1} parent=31 // pred_check_branch
        %3377 = sbr.rel (%p3375) target = $region36
      $region35: #{tpu_custom_call.1} parent=31 // pred_region
        _
      $region36: #{tpu_custom_call.1} parent=31 // pred_fallthru
        _
    $region32: #{tpu_custom_call.1} parent=5 // pred_fallthru
      _
    %p3378 = scmp.le.s32.totalorder 2, %s9
    // Predicated region
    $region37: #{tpu_custom_call.1} parent=5 // pred_check
      %p3379 = pneg %p3378
    $region38: #{tpu_custom_call.1} parent=5 // pred_check_branch
      %3381 = sbr.rel (%p3379) target = $region40
    $region39: #{tpu_custom_call.1} parent=5 // pred_region
      %s3382 = ssub.s32 %s9, 2
      // Predicated region
      $region41: #{tpu_custom_call.1} parent=39 // pred_check
        %p3383 = pneg %p106
      $region42: #{tpu_custom_call.1} parent=39 // pred_check_branch
        %3385 = sbr.rel (%p3383) target = $region44
      $region43: #{tpu_custom_call.1} parent=39 // pred_region
        %p3386 = scmp.lt.s32.totalorder %s15, 1
        %s3387 = scalar_select %p3386, %s15, 1
        %s3388 = smul.addr %s3387, 36
        %s3389 = smul.addr %s3388, 4
        %s3390 = scalar_lea.vmem %s3, %s3389
      $region44: #{tpu_custom_call.1} parent=39 // pred_fallthru
        _
    $region40: #{tpu_custom_call.1} parent=5 // pred_fallthru
      _
  $region6: #{tpu_custom_call.1} parent=0 // loop_footer
    %s13 = sadd.s32 1, %s9
  $region7: #{tpu_custom_call.1} parent=0 // loop_footer_branch
    %8 = sbr.rel target = $region3
  $region8: #{tpu_custom_call.1} parent=0 // loop_exit
    _

</llo_original>
